<compile_context>
chip_gen: v5e
topology: v5e:2x2
jax: 0.10.0
libtpu: 0.0.40
codegen_flags: <defaults>
</compile_context>

<pallas_src>
import jax
import jax.numpy as jnp
from jax import lax
from jax.experimental import pallas as pl
from jax.experimental.pallas import tpu as pltpu

KH = KW = 3
C_OUT = 4
N_CLASSES = 2

_CK = 2048  # 128-aligned static K chunk for the in-kernel VPU dot (bounds VMEM temps)


# ----------------------- init-time algebraic fold (runs once) ----------------
def fold_conv_into_fc(conv_w, conv_b, fc_w, fc_b, H, W):
    """Compose conv1 (1->4, 3x3, VALID) and fc1 into one linear map on the flattened
    (H*W,) input image. Exact up to f32 rounding.

    fc_w uses the torch.flatten(x, 1) column convention on an NCHW conv output:
    column index = c*(H-2)*(W-2) + i*(W-2) + j.
    """
    oh, ow = H - KH + 1, W - KW + 1
    fc_w_img = fc_w.reshape(N_CLASSES, C_OUT, oh, ow)
    w_eff = jnp.zeros((N_CLASSES, H, W), jnp.float32)
    for c in range(C_OUT):
        for di in range(KH):
            for dj in range(KW):
                w_eff = w_eff.at[:, di:di + oh, dj:dj + ow].add(
                    fc_w_img[:, c] * conv_w[c, 0, di, dj])
    b_eff = fc_b + jnp.sum(fc_w_img * conv_b[None, :, None, None], axis=(1, 2, 3))
    return w_eff.reshape(N_CLASSES, H * W), b_eff.reshape(1, N_CLASSES)


def init_effective_params(params, H, W):
    w_eff, b_eff = fold_conv_into_fc(params["conv_w"], params["conv_b"],
                                     params["fc_w"], params["fc_b"], H, W)
    return {"w_eff": w_eff, "b_eff": b_eff}


# ----------------------- fused skinny-dot + log_softmax kernel ---------------
def fused_fc_kernel(x_ref, w_ref, b_ref, o_ref):
    # x_ref: (tm, K) VMEM  -- strip of flattened input images
    # w_ref: (C, K)  VMEM  -- folded weight; constant block index -> DMA'd once, resident
    # b_ref: (1, C)  VMEM  -- folded bias, broadcast add
    # o_ref: (tm, C) VMEM  -- log-probabilities
    tm, K = x_ref.shape
    n_classes = w_ref.shape[0]

    # Skinny output (C=2): the MXU would waste >98% of every 128/256-wide pass, so the
    # dots are done on the VPU: per class, broadcast-multiply the weight row against the
    # x strip and reduce over lanes. Static 128-aligned chunks keep each elementwise
    # temporary to (tm, _CK) ~ 1 MB and give aligned, zero-cost ref slices.
    accs = [jnp.zeros((tm, 1), jnp.float32) for _ in range(n_classes)]
    for start in range(0, K, _CK):
        size = min(_CK, K - start)
        xc = x_ref[:, start:start + size]                 # (tm, size), loaded once
        for c in range(n_classes):
            wc = w_ref[c:c + 1, start:start + size]       # (1, size) -> sublane broadcast
            accs[c] = accs[c] + jnp.sum(xc * wc, axis=1, keepdims=True)

    logits = jnp.concatenate(accs, axis=1) + b_ref[...]   # (tm, C)

    # Fused, register/VMEM-resident log_softmax epilogue; single output store.
    m = jnp.max(logits, axis=1, keepdims=True)
    lse = m + jnp.log(jnp.sum(jnp.exp(logits - m), axis=1, keepdims=True))
    o_ref[...] = logits - lse


def fused_forward(x_flat, w_eff, b_eff, *, block_n=128):
    N, K = x_flat.shape
    C = w_eff.shape[0]
    # Large batch strips -> HBM-read roofline. tm=128 (multiple of 8) keeps the
    # double-buffered x strip (~23 MB) + in-kernel temps inside every generation's
    # physical VMEM (v7x: 64 MiB) once the scoped limit is raised below.
    # Small batches use a single full-batch block (full-dim blocks bypass the (8,128)
    # divisibility rule). A trailing partial block (N % tm != 0) is handled by Pallas
    # with masked writes; outputs are row-independent so this is safe.
    tm = N if N < block_n else block_n
    grid = (pl.cdiv(N, tm),)
    return pl.pallas_call(
        fused_fc_kernel,
        out_shape=jax.ShapeDtypeStruct((N, C), jnp.float32),
        grid=grid,
        in_specs=[
            pl.BlockSpec((tm, K), lambda i: (i, 0)),      # streamed image strip
            pl.BlockSpec((C, K), lambda i: (0, 0)),       # resident folded weight
            pl.BlockSpec((1, C), lambda i: (0, 0)),       # resident folded bias
        ],
        out_specs=pl.BlockSpec((tm, C), lambda i: (i, 0)),
        compiler_params=pltpu.CompilerParams(
            dimension_semantics=("parallel",),            # megacore batch split on v7x
            vmem_limit_bytes=48 * 1024 * 1024),           # > v5e/v6e/v7x scoped defaults
    )(x_flat, w_eff, b_eff)


# ----------------------- full forward ----------------------------------------
@jax.jit
def net_forward(eff, x):
    # (N,1,H,W) -> (N, H*W): contiguous, metadata-only reshape (no extra HBM traffic).
    x_flat = x.reshape(x.shape[0], -1)
    return fused_forward(x_flat, eff["w_eff"], eff["b_eff"])


# ----------------------- pure-JAX reference (unfused, PyTorch semantics) -----
def ref_forward(params, x):
    y = lax.conv_general_dilated(
        x, params["conv_w"], window_strides=(1, 1), padding="VALID",
        dimension_numbers=("NCHW", "OIHW", "NCHW"))
    y = y + params["conv_b"].reshape(1, C_OUT, 1, 1)
    yf = y.reshape(y.shape[0], -1)
    logits = yf @ params["fc_w"].T + params["fc_b"]
    return jax.nn.log_softmax(logits, axis=1)


if __name__ == "__main__":
    # fc1 = Linear(87616, 2) fixes the input to (N, 1, 150, 150): 4 * 148 * 148 == 87616.
    N, H, W = 2, 150, 150
    in_features = C_OUT * (H - 2) * (W - 2)
    assert in_features == 87616

    key = jax.random.PRNGKey(0)
    kx, kcw, kcb, kfw, kfb = jax.random.split(key, 5)
    x = jax.random.normal(kx, (N, 1, H, W), jnp.float32)
    params = {
        "conv_w": jax.random.normal(kcw, (C_OUT, 1, KH, KW), jnp.float32) / 3.0,
        "conv_b": jax.random.normal(kcb, (C_OUT,), jnp.float32) * 0.1,
        "fc_w": jax.random.normal(kfw, (N_CLASSES, in_features), jnp.float32)
                * (1.0 / float(in_features) ** 0.5),
        "fc_b": jax.random.normal(kfb, (N_CLASSES,), jnp.float32) * 0.1,
    }

    # One-time parameter preprocessing (outside the forward hot path).
    eff = init_effective_params(params, H, W)

    out = jax.block_until_ready(net_forward(eff, x))
    ref = jax.block_until_ready(ref_forward(params, x))

    assert out.shape == (N, N_CLASSES)
    err = float(jnp.max(jnp.abs(out - ref)))
    # f32 end-to-end; only difference vs the unfused reference is f32 summation order.
    assert err < 2e-3, f"mismatch vs reference: max abs err = {err}"
    print("KERNEL_OK")
</pallas_src>

<mosaic_0001>
module attributes {stable_mosaic.version = 11 : i64} {
  func.func @fused_fc_kernel(%arg0: i32, %arg1: memref<2x22500xf32, #tpu.memory_space<vmem>>, %arg2: memref<2x22500xf32, #tpu.memory_space<vmem>>, %arg3: memref<1x2xf32, #tpu.memory_space<vmem>>, %arg4: memref<2x2xf32, #tpu.memory_space<vmem>>) attributes {dimension_semantics = [#tpu.dimension_semantics<parallel>], iteration_bounds = array<i64: 1>, scalar_prefetch = 0 : i64, scratch_operands = 0 : i64, tpu.core_type = #tpu.core_type<tc>, window_params = [{transform_indices = @transform_0, window_bounds = array<i64: 2, 22500>}, {pipeline_mode = #tpu.pipeline_mode<synchronous>, transform_indices = @transform_1, window_bounds = array<i64: 2, 22500>}, {pipeline_mode = #tpu.pipeline_mode<synchronous>, transform_indices = @transform_2, window_bounds = array<i64: 1, 2>}, {transform_indices = @transform_3, window_bounds = array<i64: 2, 2>}]} {
    %cst = arith.constant 0.000000e+00 : f32
    %0 = vector.broadcast %cst : f32 to vector<2x1xf32>
    %cst_0 = arith.constant 0.000000e+00 : f32
    %1 = vector.broadcast %cst_0 : f32 to vector<2x1xf32>
    %c0 = arith.constant 0 : index
    %c0_1 = arith.constant 0 : index
    %2 = vector.load %arg1[%c0, %c0_1] : memref<2x22500xf32, #tpu.memory_space<vmem>>, vector<2x2048xf32>
    %c0_2 = arith.constant 0 : index
    %c0_3 = arith.constant 0 : index
    %3 = vector.load %arg2[%c0_2, %c0_3] : memref<2x22500xf32, #tpu.memory_space<vmem>>, vector<1x2048xf32>
    %4 = vector.broadcast %3 : vector<1x2048xf32> to vector<2x2048xf32>
    %5 = arith.mulf %2, %4 : vector<2x2048xf32>
    %cst_4 = arith.constant dense<0.000000e+00> : vector<2xf32>
    %6 = vector.multi_reduction <add>, %5, %cst_4 [1] : vector<2x2048xf32> to vector<2xf32>
    %7 = vector.shape_cast %6 : vector<2xf32> to vector<2x1xf32>
    %8 = arith.addf %0, %7 : vector<2x1xf32>
    %c1 = arith.constant 1 : index
    %c0_5 = arith.constant 0 : index
    %9 = vector.load %arg2[%c1, %c0_5] : memref<2x22500xf32, #tpu.memory_space<vmem>>, vector<1x2048xf32>
    %10 = vector.broadcast %9 : vector<1x2048xf32> to vector<2x2048xf32>
    %11 = arith.mulf %2, %10 : vector<2x2048xf32>
    %cst_6 = arith.constant dense<0.000000e+00> : vector<2xf32>
    %12 = vector.multi_reduction <add>, %11, %cst_6 [1] : vector<2x2048xf32> to vector<2xf32>
    %13 = vector.shape_cast %12 : vector<2xf32> to vector<2x1xf32>
    %14 = arith.addf %1, %13 : vector<2x1xf32>
    %c0_7 = arith.constant 0 : index
    %c2048 = arith.constant 2048 : index
    %15 = vector.load %arg1[%c0_7, %c2048] : memref<2x22500xf32, #tpu.memory_space<vmem>>, vector<2x2048xf32>
    %c0_8 = arith.constant 0 : index
    %c2048_9 = arith.constant 2048 : index
    %16 = vector.load %arg2[%c0_8, %c2048_9] : memref<2x22500xf32, #tpu.memory_space<vmem>>, vector<1x2048xf32>
    %17 = vector.broadcast %16 : vector<1x2048xf32> to vector<2x2048xf32>
    %18 = arith.mulf %15, %17 : vector<2x2048xf32>
    %cst_10 = arith.constant dense<0.000000e+00> : vector<2xf32>
    %19 = vector.multi_reduction <add>, %18, %cst_10 [1] : vector<2x2048xf32> to vector<2xf32>
    %20 = vector.shape_cast %19 : vector<2xf32> to vector<2x1xf32>
    %21 = arith.addf %8, %20 : vector<2x1xf32>
    %c1_11 = arith.constant 1 : index
    %c2048_12 = arith.constant 2048 : index
    %22 = vector.load %arg2[%c1_11, %c2048_12] : memref<2x22500xf32, #tpu.memory_space<vmem>>, vector<1x2048xf32>
    %23 = vector.broadcast %22 : vector<1x2048xf32> to vector<2x2048xf32>
    %24 = arith.mulf %15, %23 : vector<2x2048xf32>
    %cst_13 = arith.constant dense<0.000000e+00> : vector<2xf32>
    %25 = vector.multi_reduction <add>, %24, %cst_13 [1] : vector<2x2048xf32> to vector<2xf32>
    %26 = vector.shape_cast %25 : vector<2xf32> to vector<2x1xf32>
    %27 = arith.addf %14, %26 : vector<2x1xf32>
    %c0_14 = arith.constant 0 : index
    %c4096 = arith.constant 4096 : index
    %28 = vector.load %arg1[%c0_14, %c4096] : memref<2x22500xf32, #tpu.memory_space<vmem>>, vector<2x2048xf32>
    %c0_15 = arith.constant 0 : index
    %c4096_16 = arith.constant 4096 : index
    %29 = vector.load %arg2[%c0_15, %c4096_16] : memref<2x22500xf32, #tpu.memory_space<vmem>>, vector<1x2048xf32>
    %30 = vector.broadcast %29 : vector<1x2048xf32> to vector<2x2048xf32>
    %31 = arith.mulf %28, %30 : vector<2x2048xf32>
    %cst_17 = arith.constant dense<0.000000e+00> : vector<2xf32>
    %32 = vector.multi_reduction <add>, %31, %cst_17 [1] : vector<2x2048xf32> to vector<2xf32>
    %33 = vector.shape_cast %32 : vector<2xf32> to vector<2x1xf32>
    %34 = arith.addf %21, %33 : vector<2x1xf32>
    %c1_18 = arith.constant 1 : index
    %c4096_19 = arith.constant 4096 : index
    %35 = vector.load %arg2[%c1_18, %c4096_19] : memref<2x22500xf32, #tpu.memory_space<vmem>>, vector<1x2048xf32>
    %36 = vector.broadcast %35 : vector<1x2048xf32> to vector<2x2048xf32>
    %37 = arith.mulf %28, %36 : vector<2x2048xf32>
    %cst_20 = arith.constant dense<0.000000e+00> : vector<2xf32>
    %38 = vector.multi_reduction <add>, %37, %cst_20 [1] : vector<2x2048xf32> to vector<2xf32>
    %39 = vector.shape_cast %38 : vector<2xf32> to vector<2x1xf32>
    %40 = arith.addf %27, %39 : vector<2x1xf32>
    %c0_21 = arith.constant 0 : index
    %c6144 = arith.constant 6144 : index
    %41 = vector.load %arg1[%c0_21, %c6144] : memref<2x22500xf32, #tpu.memory_space<vmem>>, vector<2x2048xf32>
    %c0_22 = arith.constant 0 : index
    %c6144_23 = arith.constant 6144 : index
    %42 = vector.load %arg2[%c0_22, %c6144_23] : memref<2x22500xf32, #tpu.memory_space<vmem>>, vector<1x2048xf32>
    %43 = vector.broadcast %42 : vector<1x2048xf32> to vector<2x2048xf32>
    %44 = arith.mulf %41, %43 : vector<2x2048xf32>
    %cst_24 = arith.constant dense<0.000000e+00> : vector<2xf32>
    %45 = vector.multi_reduction <add>, %44, %cst_24 [1] : vector<2x2048xf32> to vector<2xf32>
    %46 = vector.shape_cast %45 : vector<2xf32> to vector<2x1xf32>
    %47 = arith.addf %34, %46 : vector<2x1xf32>
    %c1_25 = arith.constant 1 : index
    %c6144_26 = arith.constant 6144 : index
    %48 = vector.load %arg2[%c1_25, %c6144_26] : memref<2x22500xf32, #tpu.memory_space<vmem>>, vector<1x2048xf32>
    %49 = vector.broadcast %48 : vector<1x2048xf32> to vector<2x2048xf32>
    %50 = arith.mulf %41, %49 : vector<2x2048xf32>
    %cst_27 = arith.constant dense<0.000000e+00> : vector<2xf32>
    %51 = vector.multi_reduction <add>, %50, %cst_27 [1] : vector<2x2048xf32> to vector<2xf32>
    %52 = vector.shape_cast %51 : vector<2xf32> to vector<2x1xf32>
    %53 = arith.addf %40, %52 : vector<2x1xf32>
    %c0_28 = arith.constant 0 : index
    %c8192 = arith.constant 8192 : index
    %54 = vector.load %arg1[%c0_28, %c8192] : memref<2x22500xf32, #tpu.memory_space<vmem>>, vector<2x2048xf32>
    %c0_29 = arith.constant 0 : index
    %c8192_30 = arith.constant 8192 : index
    %55 = vector.load %arg2[%c0_29, %c8192_30] : memref<2x22500xf32, #tpu.memory_space<vmem>>, vector<1x2048xf32>
    %56 = vector.broadcast %55 : vector<1x2048xf32> to vector<2x2048xf32>
    %57 = arith.mulf %54, %56 : vector<2x2048xf32>
    %cst_31 = arith.constant dense<0.000000e+00> : vector<2xf32>
    %58 = vector.multi_reduction <add>, %57, %cst_31 [1] : vector<2x2048xf32> to vector<2xf32>
    %59 = vector.shape_cast %58 : vector<2xf32> to vector<2x1xf32>
    %60 = arith.addf %47, %59 : vector<2x1xf32>
    %c1_32 = arith.constant 1 : index
    %c8192_33 = arith.constant 8192 : index
    %61 = vector.load %arg2[%c1_32, %c8192_33] : memref<2x22500xf32, #tpu.memory_space<vmem>>, vector<1x2048xf32>
    %62 = vector.broadcast %61 : vector<1x2048xf32> to vector<2x2048xf32>
    %63 = arith.mulf %54, %62 : vector<2x2048xf32>
    %cst_34 = arith.constant dense<0.000000e+00> : vector<2xf32>
    %64 = vector.multi_reduction <add>, %63, %cst_34 [1] : vector<2x2048xf32> to vector<2xf32>
    %65 = vector.shape_cast %64 : vector<2xf32> to vector<2x1xf32>
    %66 = arith.addf %53, %65 : vector<2x1xf32>
    %c0_35 = arith.constant 0 : index
    %c10240 = arith.constant 10240 : index
    %67 = vector.load %arg1[%c0_35, %c10240] : memref<2x22500xf32, #tpu.memory_space<vmem>>, vector<2x2048xf32>
    %c0_36 = arith.constant 0 : index
    %c10240_37 = arith.constant 10240 : index
    %68 = vector.load %arg2[%c0_36, %c10240_37] : memref<2x22500xf32, #tpu.memory_space<vmem>>, vector<1x2048xf32>
    %69 = vector.broadcast %68 : vector<1x2048xf32> to vector<2x2048xf32>
    %70 = arith.mulf %67, %69 : vector<2x2048xf32>
    %cst_38 = arith.constant dense<0.000000e+00> : vector<2xf32>
    %71 = vector.multi_reduction <add>, %70, %cst_38 [1] : vector<2x2048xf32> to vector<2xf32>
    %72 = vector.shape_cast %71 : vector<2xf32> to vector<2x1xf32>
    %73 = arith.addf %60, %72 : vector<2x1xf32>
    %c1_39 = arith.constant 1 : index
    %c10240_40 = arith.constant 10240 : index
    %74 = vector.load %arg2[%c1_39, %c10240_40] : memref<2x22500xf32, #tpu.memory_space<vmem>>, vector<1x2048xf32>
    %75 = vector.broadcast %74 : vector<1x2048xf32> to vector<2x2048xf32>
    %76 = arith.mulf %67, %75 : vector<2x2048xf32>
    %cst_41 = arith.constant dense<0.000000e+00> : vector<2xf32>
    %77 = vector.multi_reduction <add>, %76, %cst_41 [1] : vector<2x2048xf32> to vector<2xf32>
    %78 = vector.shape_cast %77 : vector<2xf32> to vector<2x1xf32>
    %79 = arith.addf %66, %78 : vector<2x1xf32>
    %c0_42 = arith.constant 0 : index
    %c12288 = arith.constant 12288 : index
    %80 = vector.load %arg1[%c0_42, %c12288] : memref<2x22500xf32, #tpu.memory_space<vmem>>, vector<2x2048xf32>
    %c0_43 = arith.constant 0 : index
    %c12288_44 = arith.constant 12288 : index
    %81 = vector.load %arg2[%c0_43, %c12288_44] : memref<2x22500xf32, #tpu.memory_space<vmem>>, vector<1x2048xf32>
    %82 = vector.broadcast %81 : vector<1x2048xf32> to vector<2x2048xf32>
    %83 = arith.mulf %80, %82 : vector<2x2048xf32>
    %cst_45 = arith.constant dense<0.000000e+00> : vector<2xf32>
    %84 = vector.multi_reduction <add>, %83, %cst_45 [1] : vector<2x2048xf32> to vector<2xf32>
    %85 = vector.shape_cast %84 : vector<2xf32> to vector<2x1xf32>
    %86 = arith.addf %73, %85 : vector<2x1xf32>
    %c1_46 = arith.constant 1 : index
    %c12288_47 = arith.constant 12288 : index
    %87 = vector.load %arg2[%c1_46, %c12288_47] : memref<2x22500xf32, #tpu.memory_space<vmem>>, vector<1x2048xf32>
    %88 = vector.broadcast %87 : vector<1x2048xf32> to vector<2x2048xf32>
    %89 = arith.mulf %80, %88 : vector<2x2048xf32>
    %cst_48 = arith.constant dense<0.000000e+00> : vector<2xf32>
    %90 = vector.multi_reduction <add>, %89, %cst_48 [1] : vector<2x2048xf32> to vector<2xf32>
    %91 = vector.shape_cast %90 : vector<2xf32> to vector<2x1xf32>
    %92 = arith.addf %79, %91 : vector<2x1xf32>
    %c0_49 = arith.constant 0 : index
    %c14336 = arith.constant 14336 : index
    %93 = vector.load %arg1[%c0_49, %c14336] : memref<2x22500xf32, #tpu.memory_space<vmem>>, vector<2x2048xf32>
    %c0_50 = arith.constant 0 : index
    %c14336_51 = arith.constant 14336 : index
    %94 = vector.load %arg2[%c0_50, %c14336_51] : memref<2x22500xf32, #tpu.memory_space<vmem>>, vector<1x2048xf32>
    %95 = vector.broadcast %94 : vector<1x2048xf32> to vector<2x2048xf32>
    %96 = arith.mulf %93, %95 : vector<2x2048xf32>
    %cst_52 = arith.constant dense<0.000000e+00> : vector<2xf32>
    %97 = vector.multi_reduction <add>, %96, %cst_52 [1] : vector<2x2048xf32> to vector<2xf32>
    %98 = vector.shape_cast %97 : vector<2xf32> to vector<2x1xf32>
    %99 = arith.addf %86, %98 : vector<2x1xf32>
    %c1_53 = arith.constant 1 : index
    %c14336_54 = arith.constant 14336 : index
    %100 = vector.load %arg2[%c1_53, %c14336_54] : memref<2x22500xf32, #tpu.memory_space<vmem>>, vector<1x2048xf32>
    %101 = vector.broadcast %100 : vector<1x2048xf32> to vector<2x2048xf32>
    %102 = arith.mulf %93, %101 : vector<2x2048xf32>
    %cst_55 = arith.constant dense<0.000000e+00> : vector<2xf32>
    %103 = vector.multi_reduction <add>, %102, %cst_55 [1] : vector<2x2048xf32> to vector<2xf32>
    %104 = vector.shape_cast %103 : vector<2xf32> to vector<2x1xf32>
    %105 = arith.addf %92, %104 : vector<2x1xf32>
    %c0_56 = arith.constant 0 : index
    %c16384 = arith.constant 16384 : index
    %106 = vector.load %arg1[%c0_56, %c16384] : memref<2x22500xf32, #tpu.memory_space<vmem>>, vector<2x2048xf32>
    %c0_57 = arith.constant 0 : index
    %c16384_58 = arith.constant 16384 : index
    %107 = vector.load %arg2[%c0_57, %c16384_58] : memref<2x22500xf32, #tpu.memory_space<vmem>>, vector<1x2048xf32>
    %108 = vector.broadcast %107 : vector<1x2048xf32> to vector<2x2048xf32>
    %109 = arith.mulf %106, %108 : vector<2x2048xf32>
    %cst_59 = arith.constant dense<0.000000e+00> : vector<2xf32>
    %110 = vector.multi_reduction <add>, %109, %cst_59 [1] : vector<2x2048xf32> to vector<2xf32>
    %111 = vector.shape_cast %110 : vector<2xf32> to vector<2x1xf32>
    %112 = arith.addf %99, %111 : vector<2x1xf32>
    %c1_60 = arith.constant 1 : index
    %c16384_61 = arith.constant 16384 : index
    %113 = vector.load %arg2[%c1_60, %c16384_61] : memref<2x22500xf32, #tpu.memory_space<vmem>>, vector<1x2048xf32>
    %114 = vector.broadcast %113 : vector<1x2048xf32> to vector<2x2048xf32>
    %115 = arith.mulf %106, %114 : vector<2x2048xf32>
    %cst_62 = arith.constant dense<0.000000e+00> : vector<2xf32>
    %116 = vector.multi_reduction <add>, %115, %cst_62 [1] : vector<2x2048xf32> to vector<2xf32>
    %117 = vector.shape_cast %116 : vector<2xf32> to vector<2x1xf32>
    %118 = arith.addf %105, %117 : vector<2x1xf32>
    %c0_63 = arith.constant 0 : index
    %c18432 = arith.constant 18432 : index
    %119 = vector.load %arg1[%c0_63, %c18432] : memref<2x22500xf32, #tpu.memory_space<vmem>>, vector<2x2048xf32>
    %c0_64 = arith.constant 0 : index
    %c18432_65 = arith.constant 18432 : index
    %120 = vector.load %arg2[%c0_64, %c18432_65] : memref<2x22500xf32, #tpu.memory_space<vmem>>, vector<1x2048xf32>
    %121 = vector.broadcast %120 : vector<1x2048xf32> to vector<2x2048xf32>
    %122 = arith.mulf %119, %121 : vector<2x2048xf32>
    %cst_66 = arith.constant dense<0.000000e+00> : vector<2xf32>
    %123 = vector.multi_reduction <add>, %122, %cst_66 [1] : vector<2x2048xf32> to vector<2xf32>
    %124 = vector.shape_cast %123 : vector<2xf32> to vector<2x1xf32>
    %125 = arith.addf %112, %124 : vector<2x1xf32>
    %c1_67 = arith.constant 1 : index
    %c18432_68 = arith.constant 18432 : index
    %126 = vector.load %arg2[%c1_67, %c18432_68] : memref<2x22500xf32, #tpu.memory_space<vmem>>, vector<1x2048xf32>
    %127 = vector.broadcast %126 : vector<1x2048xf32> to vector<2x2048xf32>
    %128 = arith.mulf %119, %127 : vector<2x2048xf32>
    %cst_69 = arith.constant dense<0.000000e+00> : vector<2xf32>
    %129 = vector.multi_reduction <add>, %128, %cst_69 [1] : vector<2x2048xf32> to vector<2xf32>
    %130 = vector.shape_cast %129 : vector<2xf32> to vector<2x1xf32>
    %131 = arith.addf %118, %130 : vector<2x1xf32>
    %c0_70 = arith.constant 0 : index
    %c20480 = arith.constant 20480 : index
    %132 = vector.load %arg1[%c0_70, %c20480] : memref<2x22500xf32, #tpu.memory_space<vmem>>, vector<2x2020xf32>
    %c0_71 = arith.constant 0 : index
    %c20480_72 = arith.constant 20480 : index
    %133 = vector.load %arg2[%c0_71, %c20480_72] : memref<2x22500xf32, #tpu.memory_space<vmem>>, vector<1x2020xf32>
    %134 = vector.broadcast %133 : vector<1x2020xf32> to vector<2x2020xf32>
    %135 = arith.mulf %132, %134 : vector<2x2020xf32>
    %cst_73 = arith.constant dense<0.000000e+00> : vector<2xf32>
    %136 = vector.multi_reduction <add>, %135, %cst_73 [1] : vector<2x2020xf32> to vector<2xf32>
    %137 = vector.shape_cast %136 : vector<2xf32> to vector<2x1xf32>
    %138 = arith.addf %125, %137 : vector<2x1xf32>
    %c1_74 = arith.constant 1 : index
    %c20480_75 = arith.constant 20480 : index
    %139 = vector.load %arg2[%c1_74, %c20480_75] : memref<2x22500xf32, #tpu.memory_space<vmem>>, vector<1x2020xf32>
    %140 = vector.broadcast %139 : vector<1x2020xf32> to vector<2x2020xf32>
    %141 = arith.mulf %132, %140 : vector<2x2020xf32>
    %cst_76 = arith.constant dense<0.000000e+00> : vector<2xf32>
    %142 = vector.multi_reduction <add>, %141, %cst_76 [1] : vector<2x2020xf32> to vector<2xf32>
    %143 = vector.shape_cast %142 : vector<2xf32> to vector<2x1xf32>
    %144 = arith.addf %131, %143 : vector<2x1xf32>
    %145 = tpu.concatenate %138, %144 in 1 : vector<2x1xf32>, vector<2x1xf32> -> vector<2x2xf32>
    %c0_77 = arith.constant 0 : index
    %c0_78 = arith.constant 0 : index
    %146 = vector.load %arg3[%c0_77, %c0_78] : memref<1x2xf32, #tpu.memory_space<vmem>>, vector<1x2xf32>
    %147 = vector.broadcast %146 : vector<1x2xf32> to vector<2x2xf32>
    %148 = arith.addf %145, %147 : vector<2x2xf32>
    %cst_79 = arith.constant dense<0xFF800000> : vector<2xf32>
    %149 = vector.multi_reduction <maximumf>, %148, %cst_79 [1] : vector<2x2xf32> to vector<2xf32>
    %150 = vector.shape_cast %149 : vector<2xf32> to vector<2x1xf32>
    %151 = vector.broadcast %150 : vector<2x1xf32> to vector<2x2xf32>
    %152 = arith.subf %148, %151 : vector<2x2xf32>
    %153 = math.exp %152 : vector<2x2xf32>
    %cst_80 = arith.constant dense<0.000000e+00> : vector<2xf32>
    %154 = vector.multi_reduction <add>, %153, %cst_80 [1] : vector<2x2xf32> to vector<2xf32>
    %155 = vector.shape_cast %154 : vector<2xf32> to vector<2x1xf32>
    %156 = math.log %155 : vector<2x1xf32>
    %157 = arith.addf %150, %156 : vector<2x1xf32>
    %158 = vector.broadcast %157 : vector<2x1xf32> to vector<2x2xf32>
    %159 = arith.subf %148, %158 : vector<2x2xf32>
    %c0_81 = arith.constant 0 : index
    %c0_82 = arith.constant 0 : index
    %160 = vector.load %arg4[%c0_81, %c0_82] : memref<2x2xf32, #tpu.memory_space<vmem>>, vector<2x2xf32>
    tpu.vector_store %arg4[%c0_81, %c0_82], %159 {strides = array<i32>} : memref<2x2xf32, #tpu.memory_space<vmem>>, vector<2x2xf32>,
    return
  }
  func.func @transform_0(%arg0: i32) -> (i32, i32) {
    %c0_i32 = arith.constant 0 : i32
    %c0_i32_0 = arith.constant 0 : i32
    return %arg0, %c0_i32 : i32, i32
  }
  func.func @transform_1(%arg0: i32) -> (i32, i32) {
    %c0_i32 = arith.constant 0 : i32
    %c0_i32_0 = arith.constant 0 : i32
    %c0_i32_1 = arith.constant 0 : i32
    return %c0_i32, %c0_i32_0 : i32, i32
  }
  func.func @transform_2(%arg0: i32) -> (i32, i32) {
    %c0_i32 = arith.constant 0 : i32
    %c0_i32_0 = arith.constant 0 : i32
    %c0_i32_1 = arith.constant 0 : i32
    return %c0_i32, %c0_i32_0 : i32, i32
  }
  func.func @transform_3(%arg0: i32) -> (i32, i32) {
    %c0_i32 = arith.constant 0 : i32
    %c0_i32_0 = arith.constant 0 : i32
    return %arg0, %c0_i32 : i32, i32
  }
}

</mosaic_0001>

<llo_original>
// kernel: net_forward.1
$region0: #{net_forward.1}
  #allocation0 [shape = 'u32[]', space=smem, size = 0x4, offset = 0x4, fixed_abs, tag = 'smem constant byte address 0x4 - core index']
  #allocation1 [shape = 'u32[72,128]{1,0:T(1,128)}', space=vmem, size = 0x9000, scoped, tag = 'internal scratch']
  %s0 = inlined_call_operand.vmem [shape: f32[2,22500], index: 0, kind: input, shape index: {}]
  %s1 = inlined_call_operand.vmem [shape: f32[2,22500], index: 1, kind: input, shape index: {}]
  %s2 = inlined_call_operand.vmem [shape: f32[1,2], index: 2, kind: input, shape index: {}]
  %s3 = inlined_call_operand.hbm [shape: f32[2,2], index: 3, kind: output, shape index: {}]
  %s4 = sld [smem:[#allocation0]]
  $region22: #{net_forward.1} parent=0
    _
  %s6 = ssub.s32 1, %s4
  %s7 = scalar_select 0, %s6, %s4
  $region1: #{net_forward.1} parent=0
    #allocation2 [shape = 'u8[1024]{0}', space=vmem, size = 0x400, scoped, tag = 'output window, operand 0, single buffered']
    #allocation3 [shape = 's32[1]{0}', space=sflag, size = 0x4, scoped, tag = 'scoped memory for net_forward.1']
    %8 = vsyncpa [#allocation3], 0
    // Predicated region
    $region2: #{net_forward.1} parent=1 // pred_check
      _
    $region3: #{net_forward.1} parent=1 // pred_check_branch
      %10 = sbr.rel (0) target = $region5
    $region4: #{net_forward.1} parent=1 // pred_region
      _
    $region5: #{net_forward.1} parent=1 // pred_fallthru
      _
    // Predicated region
    $region6: #{net_forward.1} parent=1 // pred_check
      _
    $region7: #{net_forward.1} parent=1 // pred_check_branch
      %12 = sbr.rel (0) target = $region9
    $region8: #{net_forward.1} parent=1 // pred_region
      _
    $region9: #{net_forward.1} parent=1 // pred_fallthru
      _
    // Predicated region
    $region10: #{net_forward.1} parent=1 // pred_check
      _
    $region11: #{net_forward.1} parent=1 // pred_check_branch
      %14 = sbr.rel (0) target = $region13
    $region12: #{net_forward.1} parent=1 // pred_region
      _
    $region13: #{net_forward.1} parent=1 // pred_fallthru
      _
    %v15 = vld [vmem:[%s0] sm:$0xff]
    %v16 = vld [vmem:[%s0 + $0x8] sm:$0xff]
    %v17 = vld [vmem:[%s0 + $0x10] sm:$0xff]
    %v18 = vld [vmem:[%s0 + $0x18] sm:$0xff]
    %v19 = vld [vmem:[%s1] ss:$2 sm:$0xff]
    %s20 = scalar_lea.vmem %s1, 16
    %v21 = vld [vmem:[%s20] ss:$2 sm:$0xff]
    %v24 = vperm.slane %v19, 0
    %v25 = vperm.slane %v19, 1
    %v26 = vperm.slane %v19, 2
    %v27 = vperm.slane %v19, 3
    %v28 = vperm.slane %v19, 4
    %v29 = vperm.slane %v19, 5
    %v30 = vperm.slane %v19, 6
    %v31 = vperm.slane %v19, 7
    %v32 = vperm.slane %v21, 0
    %v33 = vperm.slane %v21, 1
    %v34 = vperm.slane %v21, 2
    %v35 = vperm.slane %v21, 3
    %v36 = vperm.slane %v21, 4
    %v37 = vperm.slane %v21, 5
    %v38 = vperm.slane %v21, 6
    %v39 = vperm.slane %v21, 7
    %v40 = vrot.slane %v25, 6
    %v41 = vrot.slane %v26, 4
    %v42 = vrot.slane %v27, 2
    %v43 = vrot.slane %v29, 6
    %v44 = vrot.slane %v30, 4
    %v45 = vrot.slane %v31, 2
    %v46 = vrot.slane %v33, 6
    %v47 = vrot.slane %v34, 4
    %v48 = vrot.slane %v35, 2
    %v49 = vrot.slane %v37, 6
    %v50 = vrot.slane %v38, 4
    %v51 = vrot.slane %v39, 2
    %vm52 = vcmask 1041408
    %v53 = vsel %vm52, %v24, %v40
    %vm54 = vcmask 1045508
    %v55 = vsel %vm54, %v41, %v42
    %vm56 = vcmask 1043456
    %v57 = vsel %vm56, %v53, %v55
    %v58 = vsel %vm52, %v28, %v43
    %v59 = vsel %vm54, %v44, %v45
    %v60 = vsel %vm56, %v58, %v59
    %v61 = vsel %vm52, %v32, %v46
    %v62 = vsel %vm54, %v47, %v48
    %v63 = vsel %vm56, %v61, %v62
    %v64 = vsel %vm52, %v36, %v49
    %v65 = vsel %vm54, %v50, %v51
    %v66 = vsel %vm56, %v64, %v65
    %v71 = vmul.f32 %v15, %v57
    %v72 = vmul.f32 %v16, %v60
    %v73 = vmul.f32 %v17, %v63
    %v74 = vmul.f32 %v18, %v66
    %79 = vst [vmem:[#allocation1] ss:$4 sm:$0xff] %v71
    %s80 = scalar_lea.vmem [#allocation1], 32
    %81 = vst [vmem:[%s80] ss:$4 sm:$0xff] %v72
    %v82 = vld.sshfl [vmem:[#allocation1] sm:$0xff pattern:$0x73625140]
    %v83 = vld.sshfl [vmem:[#allocation1 + $0x8] sm:$0xff pattern:$0x73625140]
    %v84 = vld.sshfl [vmem:[#allocation1 + $0x10] sm:$0xff pattern:$0x73625140]
    %v85 = vld.sshfl [vmem:[#allocation1 + $0x18] sm:$0xff pattern:$0x73625140]
    %v86 = vld.sshfl [vmem:[#allocation1 + $0x20] sm:$0xff pattern:$0x73625140]
    %v87 = vld.sshfl [vmem:[#allocation1 + $0x28] sm:$0xff pattern:$0x73625140]
    %v88 = vld.sshfl [vmem:[#allocation1 + $0x30] sm:$0xff pattern:$0x73625140]
    %v89 = vld.sshfl [vmem:[#allocation1 + $0x38] sm:$0xff pattern:$0x73625140]
    %90 = vst [vmem:[#allocation1] ss:$4 sm:$0xff] %v73
    %91 = vst [vmem:[%s80] ss:$4 sm:$0xff] %v74
    %v92 = vld.sshfl [vmem:[#allocation1] sm:$0xff pattern:$0x73625140]
    %v93 = vld.sshfl [vmem:[#allocation1 + $0x8] sm:$0xff pattern:$0x73625140]
    %v94 = vld.sshfl [vmem:[#allocation1 + $0x10] sm:$0xff pattern:$0x73625140]
    %v95 = vld.sshfl [vmem:[#allocation1 + $0x18] sm:$0xff pattern:$0x73625140]
    %v96 = vld.sshfl [vmem:[#allocation1 + $0x20] sm:$0xff pattern:$0x73625140]
    %v97 = vld.sshfl [vmem:[#allocation1 + $0x28] sm:$0xff pattern:$0x73625140]
    %v98 = vld.sshfl [vmem:[#allocation1 + $0x30] sm:$0xff pattern:$0x73625140]
    %v99 = vld.sshfl [vmem:[#allocation1 + $0x38] sm:$0xff pattern:$0x73625140]
    %v116 = vsel %vm52, %v82, 0.0
    %v117 = vsel %vm52, %v83, 0.0
    %v118 = vadd.f32 %v116, %v117
    %v119 = vsel %vm52, %v84, 0.0
    %v120 = vadd.f32 %v118, %v119
    %v121 = vsel %vm52, %v85, 0.0
    %v122 = vadd.f32 %v120, %v121
    %v123 = vsel %vm52, %v86, 0.0
    %v124 = vadd.f32 %v122, %v123
    %v125 = vsel %vm52, %v87, 0.0
    %v126 = vadd.f32 %v124, %v125
    %v127 = vsel %vm52, %v88, 0.0
    %v128 = vadd.f32 %v126, %v127
    %v129 = vsel %vm52, %v89, 0.0
    %v130 = vadd.f32 %v128, %v129
    %v131 = vsel %vm52, %v92, 0.0
    %v132 = vadd.f32 %v130, %v131
    %v133 = vsel %vm52, %v93, 0.0
    %v134 = vadd.f32 %v132, %v133
    %v135 = vsel %vm52, %v94, 0.0
    %v136 = vadd.f32 %v134, %v135
    %v137 = vsel %vm52, %v95, 0.0
    %v138 = vadd.f32 %v136, %v137
    %v139 = vsel %vm52, %v96, 0.0
    %v140 = vadd.f32 %v138, %v139
    %v141 = vsel %vm52, %v97, 0.0
    %v142 = vadd.f32 %v140, %v141
    %v143 = vsel %vm52, %v98, 0.0
    %v144 = vadd.f32 %v142, %v143
    %v145 = vsel %vm52, %v99, 0.0
    %v146 = vadd.f32 %v144, %v145
    %147 = vadd.xlane.f32.xlu0 %v146
    %v148 = vpop.xlane.xlu0 %147
    %v149 = vadd.f32 %v148, 0.0
    %s150 = scalar_lea.vmem %s1, 1
    %v151 = vld [vmem:[%s150] ss:$2 sm:$0xff]
    %s152 = scalar_lea.vmem %s1, 17
    %v153 = vld [vmem:[%s152] ss:$2 sm:$0xff]
    %v156 = vperm.slane %v151, 0
    %v157 = vperm.slane %v151, 1
    %v158 = vperm.slane %v151, 2
    %v159 = vperm.slane %v151, 3
    %v160 = vperm.slane %v151, 4
    %v161 = vperm.slane %v151, 5
    %v162 = vperm.slane %v151, 6
    %v163 = vperm.slane %v151, 7
    %v164 = vperm.slane %v153, 0
    %v165 = vperm.slane %v153, 1
    %v166 = vperm.slane %v153, 2
    %v167 = vperm.slane %v153, 3
    %v168 = vperm.slane %v153, 4
    %v169 = vperm.slane %v153, 5
    %v170 = vperm.slane %v153, 6
    %v171 = vperm.slane %v153, 7
    %v172 = vrot.slane %v157, 6
    %v173 = vrot.slane %v158, 4
    %v174 = vrot.slane %v159, 2
    %v175 = vrot.slane %v161, 6
    %v176 = vrot.slane %v162, 4
    %v177 = vrot.slane %v163, 2
    %v178 = vrot.slane %v165, 6
    %v179 = vrot.slane %v166, 4
    %v180 = vrot.slane %v167, 2
    %v181 = vrot.slane %v169, 6
    %v182 = vrot.slane %v170, 4
    %v183 = vrot.slane %v171, 2
    %v184 = vsel %vm52, %v156, %v172
    %v185 = vsel %vm54, %v173, %v174
    %v186 = vsel %vm56, %v184, %v185
    %v187 = vsel %vm52, %v160, %v175
    %v188 = vsel %vm54, %v176, %v177
    %v189 = vsel %vm56, %v187, %v188
    %v190 = vsel %vm52, %v164, %v178
    %v191 = vsel %vm54, %v179, %v180
    %v192 = vsel %vm56, %v190, %v191
    %v193 = vsel %vm52, %v168, %v181
    %v194 = vsel %vm54, %v182, %v183
    %v195 = vsel %vm56, %v193, %v194
    %v200 = vmul.f32 %v15, %v186
    %v201 = vmul.f32 %v16, %v189
    %v202 = vmul.f32 %v17, %v192
    %v203 = vmul.f32 %v18, %v195
    %208 = vst [vmem:[#allocation1] ss:$4 sm:$0xff] %v200
    %s209 = scalar_lea.vmem [#allocation1], 32
    %210 = vst [vmem:[%s209] ss:$4 sm:$0xff] %v201
    %v211 = vld.sshfl [vmem:[#allocation1] sm:$0xff pattern:$0x73625140]
    %v212 = vld.sshfl [vmem:[#allocation1 + $0x8] sm:$0xff pattern:$0x73625140]
    %v213 = vld.sshfl [vmem:[#allocation1 + $0x10] sm:$0xff pattern:$0x73625140]
    %v214 = vld.sshfl [vmem:[#allocation1 + $0x18] sm:$0xff pattern:$0x73625140]
    %v215 = vld.sshfl [vmem:[#allocation1 + $0x20] sm:$0xff pattern:$0x73625140]
    %v216 = vld.sshfl [vmem:[#allocation1 + $0x28] sm:$0xff pattern:$0x73625140]
    %v217 = vld.sshfl [vmem:[#allocation1 + $0x30] sm:$0xff pattern:$0x73625140]
    %v218 = vld.sshfl [vmem:[#allocation1 + $0x38] sm:$0xff pattern:$0x73625140]
    %219 = vst [vmem:[#allocation1] ss:$4 sm:$0xff] %v202
    %220 = vst [vmem:[%s209] ss:$4 sm:$0xff] %v203
    %v221 = vld.sshfl [vmem:[#allocation1] sm:$0xff pattern:$0x73625140]
    %v222 = vld.sshfl [vmem:[#allocation1 + $0x8] sm:$0xff pattern:$0x73625140]
    %v223 = vld.sshfl [vmem:[#allocation1 + $0x10] sm:$0xff pattern:$0x73625140]
    %v224 = vld.sshfl [vmem:[#allocation1 + $0x18] sm:$0xff pattern:$0x73625140]
    %v225 = vld.sshfl [vmem:[#allocation1 + $0x20] sm:$0xff pattern:$0x73625140]
    %v226 = vld.sshfl [vmem:[#allocation1 + $0x28] sm:$0xff pattern:$0x73625140]
    %v227 = vld.sshfl [vmem:[#allocation1 + $0x30] sm:$0xff pattern:$0x73625140]
    %v228 = vld.sshfl [vmem:[#allocation1 + $0x38] sm:$0xff pattern:$0x73625140]
    %v245 = vsel %vm52, %v211, 0.0
    %v246 = vsel %vm52, %v212, 0.0
    %v247 = vadd.f32 %v245, %v246
    %v248 = vsel %vm52, %v213, 0.0
    %v249 = vadd.f32 %v247, %v248
    %v250 = vsel %vm52, %v214, 0.0
    %v251 = vadd.f32 %v249, %v250
    %v252 = vsel %vm52, %v215, 0.0
    %v253 = vadd.f32 %v251, %v252
    %v254 = vsel %vm52, %v216, 0.0
    %v255 = vadd.f32 %v253, %v254
    %v256 = vsel %vm52, %v217, 0.0
    %v257 = vadd.f32 %v255, %v256
    %v258 = vsel %vm52, %v218, 0.0
    %v259 = vadd.f32 %v257, %v258
    %v260 = vsel %vm52, %v221, 0.0
    %v261 = vadd.f32 %v259, %v260
    %v262 = vsel %vm52, %v222, 0.0
    %v263 = vadd.f32 %v261, %v262
    %v264 = vsel %vm52, %v223, 0.0
    %v265 = vadd.f32 %v263, %v264
    %v266 = vsel %vm52, %v224, 0.0
    %v267 = vadd.f32 %v265, %v266
    %v268 = vsel %vm52, %v225, 0.0
    %v269 = vadd.f32 %v267, %v268
    %v270 = vsel %vm52, %v226, 0.0
    %v271 = vadd.f32 %v269, %v270
    %v272 = vsel %vm52, %v227, 0.0
    %v273 = vadd.f32 %v271, %v272
    %v274 = vsel %vm52, %v228, 0.0
    %v275 = vadd.f32 %v273, %v274
    %276 = vadd.xlane.f32.xlu0 %v275
    %v277 = vpop.xlane.xlu0 %276
    %v278 = vadd.f32 %v277, 0.0
    %v279 = vld [vmem:[%s0 + $0x20] sm:$0xff]
    %v280 = vld [vmem:[%s0 + $0x28] sm:$0xff]
    %v281 = vld [vmem:[%s0 + $0x30] sm:$0xff]
    %v282 = vld [vmem:[%s0 + $0x38] sm:$0xff]
    %s283 = scalar_lea.vmem %s1, 32
    %v284 = vld [vmem:[%s283] ss:$2 sm:$0xff]
    %s285 = scalar_lea.vmem %s1, 48
    %v286 = vld [vmem:[%s285] ss:$2 sm:$0xff]
    %v289 = vperm.slane %v284, 0
    %v290 = vperm.slane %v284, 1
    %v291 = vperm.slane %v284, 2
    %v292 = vperm.slane %v284, 3
    %v293 = vperm.slane %v284, 4
    %v294 = vperm.slane %v284, 5
    %v295 = vperm.slane %v284, 6
    %v296 = vperm.slane %v284, 7
    %v297 = vperm.slane %v286, 0
    %v298 = vperm.slane %v286, 1
    %v299 = vperm.slane %v286, 2
    %v300 = vperm.slane %v286, 3
    %v301 = vperm.slane %v286, 4
    %v302 = vperm.slane %v286, 5
    %v303 = vperm.slane %v286, 6
    %v304 = vperm.slane %v286, 7
    %v305 = vrot.slane %v290, 6
    %v306 = vrot.slane %v291, 4
    %v307 = vrot.slane %v292, 2
    %v308 = vrot.slane %v294, 6
    %v309 = vrot.slane %v295, 4
    %v310 = vrot.slane %v296, 2
    %v311 = vrot.slane %v298, 6
    %v312 = vrot.slane %v299, 4
    %v313 = vrot.slane %v300, 2
    %v314 = vrot.slane %v302, 6
    %v315 = vrot.slane %v303, 4
    %v316 = vrot.slane %v304, 2
    %v317 = vsel %vm52, %v289, %v305
    %v318 = vsel %vm54, %v306, %v307
    %v319 = vsel %vm56, %v317, %v318
    %v320 = vsel %vm52, %v293, %v308
    %v321 = vsel %vm54, %v309, %v310
    %v322 = vsel %vm56, %v320, %v321
    %v323 = vsel %vm52, %v297, %v311
    %v324 = vsel %vm54, %v312, %v313
    %v325 = vsel %vm56, %v323, %v324
    %v326 = vsel %vm52, %v301, %v314
    %v327 = vsel %vm54, %v315, %v316
    %v328 = vsel %vm56, %v326, %v327
    %v333 = vmul.f32 %v279, %v319
    %v334 = vmul.f32 %v280, %v322
    %v335 = vmul.f32 %v281, %v325
    %v336 = vmul.f32 %v282, %v328
    %341 = vst [vmem:[#allocation1] ss:$4 sm:$0xff] %v333
    %s342 = scalar_lea.vmem [#allocation1], 32
    %343 = vst [vmem:[%s342] ss:$4 sm:$0xff] %v334
    %v344 = vld.sshfl [vmem:[#allocation1] sm:$0xff pattern:$0x73625140]
    %v345 = vld.sshfl [vmem:[#allocation1 + $0x8] sm:$0xff pattern:$0x73625140]
    %v346 = vld.sshfl [vmem:[#allocation1 + $0x10] sm:$0xff pattern:$0x73625140]
    %v347 = vld.sshfl [vmem:[#allocation1 + $0x18] sm:$0xff pattern:$0x73625140]
    %v348 = vld.sshfl [vmem:[#allocation1 + $0x20] sm:$0xff pattern:$0x73625140]
    %v349 = vld.sshfl [vmem:[#allocation1 + $0x28] sm:$0xff pattern:$0x73625140]
    %v350 = vld.sshfl [vmem:[#allocation1 + $0x30] sm:$0xff pattern:$0x73625140]
    %v351 = vld.sshfl [vmem:[#allocation1 + $0x38] sm:$0xff pattern:$0x73625140]
    %352 = vst [vmem:[#allocation1] ss:$4 sm:$0xff] %v335
    %353 = vst [vmem:[%s342] ss:$4 sm:$0xff] %v336
    %v354 = vld.sshfl [vmem:[#allocation1] sm:$0xff pattern:$0x73625140]
    %v355 = vld.sshfl [vmem:[#allocation1 + $0x8] sm:$0xff pattern:$0x73625140]
    %v356 = vld.sshfl [vmem:[#allocation1 + $0x10] sm:$0xff pattern:$0x73625140]
    %v357 = vld.sshfl [vmem:[#allocation1 + $0x18] sm:$0xff pattern:$0x73625140]
    %v358 = vld.sshfl [vmem:[#allocation1 + $0x20] sm:$0xff pattern:$0x73625140]
    %v359 = vld.sshfl [vmem:[#allocation1 + $0x28] sm:$0xff pattern:$0x73625140]
    %v360 = vld.sshfl [vmem:[#allocation1 + $0x30] sm:$0xff pattern:$0x73625140]
    %v361 = vld.sshfl [vmem:[#allocation1 + $0x38] sm:$0xff pattern:$0x73625140]
    %v378 = vsel %vm52, %v344, 0.0
    %v379 = vsel %vm52, %v345, 0.0
    %v380 = vadd.f32 %v378, %v379
    %v381 = vsel %vm52, %v346, 0.0
    %v382 = vadd.f32 %v380, %v381
    %v383 = vsel %vm52, %v347, 0.0
    %v384 = vadd.f32 %v382, %v383
    %v385 = vsel %vm52, %v348, 0.0
    %v386 = vadd.f32 %v384, %v385
    %v387 = vsel %vm52, %v349, 0.0
    %v388 = vadd.f32 %v386, %v387
    %v389 = vsel %vm52, %v350, 0.0
    %v390 = vadd.f32 %v388, %v389
    %v391 = vsel %vm52, %v351, 0.0
    %v392 = vadd.f32 %v390, %v391
    %v393 = vsel %vm52, %v354, 0.0
    %v394 = vadd.f32 %v392, %v393
    %v395 = vsel %vm52, %v355, 0.0
    %v396 = vadd.f32 %v394, %v395
    %v397 = vsel %vm52, %v356, 0.0
    %v398 = vadd.f32 %v396, %v397
    %v399 = vsel %vm52, %v357, 0.0
    %v400 = vadd.f32 %v398, %v399
    %v401 = vsel %vm52, %v358, 0.0
    %v402 = vadd.f32 %v400, %v401
    %v403 = vsel %vm52, %v359, 0.0
    %v404 = vadd.f32 %v402, %v403
    %v405 = vsel %vm52, %v360, 0.0
    %v406 = vadd.f32 %v404, %v405
    %v407 = vsel %vm52, %v361, 0.0
    %v408 = vadd.f32 %v406, %v407
    %409 = vadd.xlane.f32.xlu0 %v408
    %v410 = vpop.xlane.xlu0 %409
    %v411 = vadd.f32 %v149, %v410
    %s412 = scalar_lea.vmem %s1, 33
    %v413 = vld [vmem:[%s412] ss:$2 sm:$0xff]
    %s414 = scalar_lea.vmem %s1, 49
    %v415 = vld [vmem:[%s414] ss:$2 sm:$0xff]
    %v418 = vperm.slane %v413, 0
    %v419 = vperm.slane %v413, 1
    %v420 = vperm.slane %v413, 2
    %v421 = vperm.slane %v413, 3
    %v422 = vperm.slane %v413, 4
    %v423 = vperm.slane %v413, 5
    %v424 = vperm.slane %v413, 6
    %v425 = vperm.slane %v413, 7
    %v426 = vperm.slane %v415, 0
    %v427 = vperm.slane %v415, 1
    %v428 = vperm.slane %v415, 2
    %v429 = vperm.slane %v415, 3
    %v430 = vperm.slane %v415, 4
    %v431 = vperm.slane %v415, 5
    %v432 = vperm.slane %v415, 6
    %v433 = vperm.slane %v415, 7
    %v434 = vrot.slane %v419, 6
    %v435 = vrot.slane %v420, 4
    %v436 = vrot.slane %v421, 2
    %v437 = vrot.slane %v423, 6
    %v438 = vrot.slane %v424, 4
    %v439 = vrot.slane %v425, 2
    %v440 = vrot.slane %v427, 6
    %v441 = vrot.slane %v428, 4
    %v442 = vrot.slane %v429, 2
    %v443 = vrot.slane %v431, 6
    %v444 = vrot.slane %v432, 4
    %v445 = vrot.slane %v433, 2
    %v446 = vsel %vm52, %v418, %v434
    %v447 = vsel %vm54, %v435, %v436
    %v448 = vsel %vm56, %v446, %v447
    %v449 = vsel %vm52, %v422, %v437
    %v450 = vsel %vm54, %v438, %v439
    %v451 = vsel %vm56, %v449, %v450
    %v452 = vsel %vm52, %v426, %v440
    %v453 = vsel %vm54, %v441, %v442
    %v454 = vsel %vm56, %v452, %v453
    %v455 = vsel %vm52, %v430, %v443
    %v456 = vsel %vm54, %v444, %v445
    %v457 = vsel %vm56, %v455, %v456
    %v462 = vmul.f32 %v279, %v448
    %v463 = vmul.f32 %v280, %v451
    %v464 = vmul.f32 %v281, %v454
    %v465 = vmul.f32 %v282, %v457
    %470 = vst [vmem:[#allocation1] ss:$4 sm:$0xff] %v462
    %s471 = scalar_lea.vmem [#allocation1], 32
    %472 = vst [vmem:[%s471] ss:$4 sm:$0xff] %v463
    %v473 = vld.sshfl [vmem:[#allocation1] sm:$0xff pattern:$0x73625140]
    %v474 = vld.sshfl [vmem:[#allocation1 + $0x8] sm:$0xff pattern:$0x73625140]
    %v475 = vld.sshfl [vmem:[#allocation1 + $0x10] sm:$0xff pattern:$0x73625140]
    %v476 = vld.sshfl [vmem:[#allocation1 + $0x18] sm:$0xff pattern:$0x73625140]
    %v477 = vld.sshfl [vmem:[#allocation1 + $0x20] sm:$0xff pattern:$0x73625140]
    %v478 = vld.sshfl [vmem:[#allocation1 + $0x28] sm:$0xff pattern:$0x73625140]
    %v479 = vld.sshfl [vmem:[#allocation1 + $0x30] sm:$0xff pattern:$0x73625140]
    %v480 = vld.sshfl [vmem:[#allocation1 + $0x38] sm:$0xff pattern:$0x73625140]
    %481 = vst [vmem:[#allocation1] ss:$4 sm:$0xff] %v464
    %482 = vst [vmem:[%s471] ss:$4 sm:$0xff] %v465
    %v483 = vld.sshfl [vmem:[#allocation1] sm:$0xff pattern:$0x73625140]
    %v484 = vld.sshfl [vmem:[#allocation1 + $0x8] sm:$0xff pattern:$0x73625140]
    %v485 = vld.sshfl [vmem:[#allocation1 + $0x10] sm:$0xff pattern:$0x73625140]
    %v486 = vld.sshfl [vmem:[#allocation1 + $0x18] sm:$0xff pattern:$0x73625140]
    %v487 = vld.sshfl [vmem:[#allocation1 + $0x20] sm:$0xff pattern:$0x73625140]
    %v488 = vld.sshfl [vmem:[#allocation1 + $0x28] sm:$0xff pattern:$0x73625140]
    %v489 = vld.sshfl [vmem:[#allocation1 + $0x30] sm:$0xff pattern:$0x73625140]
    %v490 = vld.sshfl [vmem:[#allocation1 + $0x38] sm:$0xff pattern:$0x73625140]
    %v507 = vsel %vm52, %v473, 0.0
    %v508 = vsel %vm52, %v474, 0.0
    %v509 = vadd.f32 %v507, %v508
    %v510 = vsel %vm52, %v475, 0.0
    %v511 = vadd.f32 %v509, %v510
    %v512 = vsel %vm52, %v476, 0.0
    %v513 = vadd.f32 %v511, %v512
    %v514 = vsel %vm52, %v477, 0.0
    %v515 = vadd.f32 %v513, %v514
    %v516 = vsel %vm52, %v478, 0.0
    %v517 = vadd.f32 %v515, %v516
    %v518 = vsel %vm52, %v479, 0.0
    %v519 = vadd.f32 %v517, %v518
    %v520 = vsel %vm52, %v480, 0.0
    %v521 = vadd.f32 %v519, %v520
    %v522 = vsel %vm52, %v483, 0.0
    %v523 = vadd.f32 %v521, %v522
    %v524 = vsel %vm52, %v484, 0.0
    %v525 = vadd.f32 %v523, %v524
    %v526 = vsel %vm52, %v485, 0.0
    %v527 = vadd.f32 %v525, %v526
    %v528 = vsel %vm52, %v486, 0.0
    %v529 = vadd.f32 %v527, %v528
    %v530 = vsel %vm52, %v487, 0.0
    %v531 = vadd.f32 %v529, %v530
    %v532 = vsel %vm52, %v488, 0.0
    %v533 = vadd.f32 %v531, %v532
    %v534 = vsel %vm52, %v489, 0.0
    %v535 = vadd.f32 %v533, %v534
    %v536 = vsel %vm52, %v490, 0.0
    %v537 = vadd.f32 %v535, %v536
    %538 = vadd.xlane.f32.xlu0 %v537
    %v539 = vpop.xlane.xlu0 %538
    %v540 = vadd.f32 %v278, %v539
    %v541 = vld [vmem:[%s0 + $0x40] sm:$0xff]
    %v542 = vld [vmem:[%s0 + $0x48] sm:$0xff]
    %v543 = vld [vmem:[%s0 + $0x50] sm:$0xff]
    %v544 = vld [vmem:[%s0 + $0x58] sm:$0xff]
    %s545 = scalar_lea.vmem %s1, 64
    %v546 = vld [vmem:[%s545] ss:$2 sm:$0xff]
    %s547 = scalar_lea.vmem %s1, 80
    %v548 = vld [vmem:[%s547] ss:$2 sm:$0xff]
    %v551 = vperm.slane %v546, 0
    %v552 = vperm.slane %v546, 1
    %v553 = vperm.slane %v546, 2
    %v554 = vperm.slane %v546, 3
    %v555 = vperm.slane %v546, 4
    %v556 = vperm.slane %v546, 5
    %v557 = vperm.slane %v546, 6
    %v558 = vperm.slane %v546, 7
    %v559 = vperm.slane %v548, 0
    %v560 = vperm.slane %v548, 1
    %v561 = vperm.slane %v548, 2
    %v562 = vperm.slane %v548, 3
    %v563 = vperm.slane %v548, 4
    %v564 = vperm.slane %v548, 5
    %v565 = vperm.slane %v548, 6
    %v566 = vperm.slane %v548, 7
    %v567 = vrot.slane %v552, 6
    %v568 = vrot.slane %v553, 4
    %v569 = vrot.slane %v554, 2
    %v570 = vrot.slane %v556, 6
    %v571 = vrot.slane %v557, 4
    %v572 = vrot.slane %v558, 2
    %v573 = vrot.slane %v560, 6
    %v574 = vrot.slane %v561, 4
    %v575 = vrot.slane %v562, 2
    %v576 = vrot.slane %v564, 6
    %v577 = vrot.slane %v565, 4
    %v578 = vrot.slane %v566, 2
    %v579 = vsel %vm52, %v551, %v567
    %v580 = vsel %vm54, %v568, %v569
    %v581 = vsel %vm56, %v579, %v580
    %v582 = vsel %vm52, %v555, %v570
    %v583 = vsel %vm54, %v571, %v572
    %v584 = vsel %vm56, %v582, %v583
    %v585 = vsel %vm52, %v559, %v573
    %v586 = vsel %vm54, %v574, %v575
    %v587 = vsel %vm56, %v585, %v586
    %v588 = vsel %vm52, %v563, %v576
    %v589 = vsel %vm54, %v577, %v578
    %v590 = vsel %vm56, %v588, %v589
    %v595 = vmul.f32 %v541, %v581
    %v596 = vmul.f32 %v542, %v584
    %v597 = vmul.f32 %v543, %v587
    %v598 = vmul.f32 %v544, %v590
    %603 = vst [vmem:[#allocation1] ss:$4 sm:$0xff] %v595
    %s604 = scalar_lea.vmem [#allocation1], 32
    %605 = vst [vmem:[%s604] ss:$4 sm:$0xff] %v596
    %v606 = vld.sshfl [vmem:[#allocation1] sm:$0xff pattern:$0x73625140]
    %v607 = vld.sshfl [vmem:[#allocation1 + $0x8] sm:$0xff pattern:$0x73625140]
    %v608 = vld.sshfl [vmem:[#allocation1 + $0x10] sm:$0xff pattern:$0x73625140]
    %v609 = vld.sshfl [vmem:[#allocation1 + $0x18] sm:$0xff pattern:$0x73625140]
    %v610 = vld.sshfl [vmem:[#allocation1 + $0x20] sm:$0xff pattern:$0x73625140]
    %v611 = vld.sshfl [vmem:[#allocation1 + $0x28] sm:$0xff pattern:$0x73625140]
    %v612 = vld.sshfl [vmem:[#allocation1 + $0x30] sm:$0xff pattern:$0x73625140]
    %v613 = vld.sshfl [vmem:[#allocation1 + $0x38] sm:$0xff pattern:$0x73625140]
    %614 = vst [vmem:[#allocation1] ss:$4 sm:$0xff] %v597
    %615 = vst [vmem:[%s604] ss:$4 sm:$0xff] %v598
    %v616 = vld.sshfl [vmem:[#allocation1] sm:$0xff pattern:$0x73625140]
    %v617 = vld.sshfl [vmem:[#allocation1 + $0x8] sm:$0xff pattern:$0x73625140]
    %v618 = vld.sshfl [vmem:[#allocation1 + $0x10] sm:$0xff pattern:$0x73625140]
    %v619 = vld.sshfl [vmem:[#allocation1 + $0x18] sm:$0xff pattern:$0x73625140]
    %v620 = vld.sshfl [vmem:[#allocation1 + $0x20] sm:$0xff pattern:$0x73625140]
    %v621 = vld.sshfl [vmem:[#allocation1 + $0x28] sm:$0xff pattern:$0x73625140]
    %v622 = vld.sshfl [vmem:[#allocation1 + $0x30] sm:$0xff pattern:$0x73625140]
    %v623 = vld.sshfl [vmem:[#allocation1 + $0x38] sm:$0xff pattern:$0x73625140]
    %v640 = vsel %vm52, %v606, 0.0
    %v641 = vsel %vm52, %v607, 0.0
    %v642 = vadd.f32 %v640, %v641
    %v643 = vsel %vm52, %v608, 0.0
    %v644 = vadd.f32 %v642, %v643
    %v645 = vsel %vm52, %v609, 0.0
    %v646 = vadd.f32 %v644, %v645
    %v647 = vsel %vm52, %v610, 0.0
    %v648 = vadd.f32 %v646, %v647
    %v649 = vsel %vm52, %v611, 0.0
    %v650 = vadd.f32 %v648, %v649
    %v651 = vsel %vm52, %v612, 0.0
    %v652 = vadd.f32 %v650, %v651
    %v653 = vsel %vm52, %v613, 0.0
    %v654 = vadd.f32 %v652, %v653
    %v655 = vsel %vm52, %v616, 0.0
    %v656 = vadd.f32 %v654, %v655
    %v657 = vsel %vm52, %v617, 0.0
    %v658 = vadd.f32 %v656, %v657
    %v659 = vsel %vm52, %v618, 0.0
    %v660 = vadd.f32 %v658, %v659
    %v661 = vsel %vm52, %v619, 0.0
    %v662 = vadd.f32 %v660, %v661
    %v663 = vsel %vm52, %v620, 0.0
    %v664 = vadd.f32 %v662, %v663
    %v665 = vsel %vm52, %v621, 0.0
    %v666 = vadd.f32 %v664, %v665
    %v667 = vsel %vm52, %v622, 0.0
    %v668 = vadd.f32 %v666, %v667
    %v669 = vsel %vm52, %v623, 0.0
    %v670 = vadd.f32 %v668, %v669
    %671 = vadd.xlane.f32.xlu0 %v670
    %v672 = vpop.xlane.xlu0 %671
    %v673 = vadd.f32 %v411, %v672
    %s674 = scalar_lea.vmem %s1, 65
    %v675 = vld [vmem:[%s674] ss:$2 sm:$0xff]
    %s676 = scalar_lea.vmem %s1, 81
    %v677 = vld [vmem:[%s676] ss:$2 sm:$0xff]
    %v680 = vperm.slane %v675, 0
    %v681 = vperm.slane %v675, 1
    %v682 = vperm.slane %v675, 2
    %v683 = vperm.slane %v675, 3
    %v684 = vperm.slane %v675, 4
    %v685 = vperm.slane %v675, 5
    %v686 = vperm.slane %v675, 6
    %v687 = vperm.slane %v675, 7
    %v688 = vperm.slane %v677, 0
    %v689 = vperm.slane %v677, 1
    %v690 = vperm.slane %v677, 2
    %v691 = vperm.slane %v677, 3
    %v692 = vperm.slane %v677, 4
    %v693 = vperm.slane %v677, 5
    %v694 = vperm.slane %v677, 6
    %v695 = vperm.slane %v677, 7
    %v696 = vrot.slane %v681, 6
    %v697 = vrot.slane %v682, 4
    %v698 = vrot.slane %v683, 2
    %v699 = vrot.slane %v685, 6
    %v700 = vrot.slane %v686, 4
    %v701 = vrot.slane %v687, 2
    %v702 = vrot.slane %v689, 6
    %v703 = vrot.slane %v690, 4
    %v704 = vrot.slane %v691, 2
    %v705 = vrot.slane %v693, 6
    %v706 = vrot.slane %v694, 4
    %v707 = vrot.slane %v695, 2
    %v708 = vsel %vm52, %v680, %v696
    %v709 = vsel %vm54, %v697, %v698
    %v710 = vsel %vm56, %v708, %v709
    %v711 = vsel %vm52, %v684, %v699
    %v712 = vsel %vm54, %v700, %v701
    %v713 = vsel %vm56, %v711, %v712
    %v714 = vsel %vm52, %v688, %v702
    %v715 = vsel %vm54, %v703, %v704
    %v716 = vsel %vm56, %v714, %v715
    %v717 = vsel %vm52, %v692, %v705
    %v718 = vsel %vm54, %v706, %v707
    %v719 = vsel %vm56, %v717, %v718
    %v724 = vmul.f32 %v541, %v710
    %v725 = vmul.f32 %v542, %v713
    %v726 = vmul.f32 %v543, %v716
    %v727 = vmul.f32 %v544, %v719
    %732 = vst [vmem:[#allocation1] ss:$4 sm:$0xff] %v724
    %s733 = scalar_lea.vmem [#allocation1], 32
    %734 = vst [vmem:[%s733] ss:$4 sm:$0xff] %v725
    %v735 = vld.sshfl [vmem:[#allocation1] sm:$0xff pattern:$0x73625140]
    %v736 = vld.sshfl [vmem:[#allocation1 + $0x8] sm:$0xff pattern:$0x73625140]
    %v737 = vld.sshfl [vmem:[#allocation1 + $0x10] sm:$0xff pattern:$0x73625140]
    %v738 = vld.sshfl [vmem:[#allocation1 + $0x18] sm:$0xff pattern:$0x73625140]
    %v739 = vld.sshfl [vmem:[#allocation1 + $0x20] sm:$0xff pattern:$0x73625140]
    %v740 = vld.sshfl [vmem:[#allocation1 + $0x28] sm:$0xff pattern:$0x73625140]
    %v741 = vld.sshfl [vmem:[#allocation1 + $0x30] sm:$0xff pattern:$0x73625140]
    %v742 = vld.sshfl [vmem:[#allocation1 + $0x38] sm:$0xff pattern:$0x73625140]
    %743 = vst [vmem:[#allocation1] ss:$4 sm:$0xff] %v726
    %744 = vst [vmem:[%s733] ss:$4 sm:$0xff] %v727
    %v745 = vld.sshfl [vmem:[#allocation1] sm:$0xff pattern:$0x73625140]
    %v746 = vld.sshfl [vmem:[#allocation1 + $0x8] sm:$0xff pattern:$0x73625140]
    %v747 = vld.sshfl [vmem:[#allocation1 + $0x10] sm:$0xff pattern:$0x73625140]
    %v748 = vld.sshfl [vmem:[#allocation1 + $0x18] sm:$0xff pattern:$0x73625140]
    %v749 = vld.sshfl [vmem:[#allocation1 + $0x20] sm:$0xff pattern:$0x73625140]
    %v750 = vld.sshfl [vmem:[#allocation1 + $0x28] sm:$0xff pattern:$0x73625140]
    %v751 = vld.sshfl [vmem:[#allocation1 + $0x30] sm:$0xff pattern:$0x73625140]
    %v752 = vld.sshfl [vmem:[#allocation1 + $0x38] sm:$0xff pattern:$0x73625140]
    %v769 = vsel %vm52, %v735, 0.0
    %v770 = vsel %vm52, %v736, 0.0
    %v771 = vadd.f32 %v769, %v770
    %v772 = vsel %vm52, %v737, 0.0
    %v773 = vadd.f32 %v771, %v772
    %v774 = vsel %vm52, %v738, 0.0
    %v775 = vadd.f32 %v773, %v774
    %v776 = vsel %vm52, %v739, 0.0
    %v777 = vadd.f32 %v775, %v776
    %v778 = vsel %vm52, %v740, 0.0
    %v779 = vadd.f32 %v777, %v778
    %v780 = vsel %vm52, %v741, 0.0
    %v781 = vadd.f32 %v779, %v780
    %v782 = vsel %vm52, %v742, 0.0
    %v783 = vadd.f32 %v781, %v782
    %v784 = vsel %vm52, %v745, 0.0
    %v785 = vadd.f32 %v783, %v784
    %v786 = vsel %vm52, %v746, 0.0
    %v787 = vadd.f32 %v785, %v786
    %v788 = vsel %vm52, %v747, 0.0
    %v789 = vadd.f32 %v787, %v788
    %v790 = vsel %vm52, %v748, 0.0
    %v791 = vadd.f32 %v789, %v790
    %v792 = vsel %vm52, %v749, 0.0
    %v793 = vadd.f32 %v791, %v792
    %v794 = vsel %vm52, %v750, 0.0
    %v795 = vadd.f32 %v793, %v794
    %v796 = vsel %vm52, %v751, 0.0
    %v797 = vadd.f32 %v795, %v796
    %v798 = vsel %vm52, %v752, 0.0
    %v799 = vadd.f32 %v797, %v798
    %800 = vadd.xlane.f32.xlu0 %v799
    %v801 = vpop.xlane.xlu0 %800
    %v802 = vadd.f32 %v540, %v801
    %v803 = vld [vmem:[%s0 + $0x60] sm:$0xff]
    %v804 = vld [vmem:[%s0 + $0x68] sm:$0xff]
    %v805 = vld [vmem:[%s0 + $0x70] sm:$0xff]
    %v806 = vld [vmem:[%s0 + $0x78] sm:$0xff]
    %s807 = scalar_lea.vmem %s1, 96
    %v808 = vld [vmem:[%s807] ss:$2 sm:$0xff]
    %s809 = scalar_lea.vmem %s1, 112
    %v810 = vld [vmem:[%s809] ss:$2 sm:$0xff]
    %v813 = vperm.slane %v808, 0
    %v814 = vperm.slane %v808, 1
    %v815 = vperm.slane %v808, 2
    %v816 = vperm.slane %v808, 3
    %v817 = vperm.slane %v808, 4
    %v818 = vperm.slane %v808, 5
    %v819 = vperm.slane %v808, 6
    %v820 = vperm.slane %v808, 7
    %v821 = vperm.slane %v810, 0
    %v822 = vperm.slane %v810, 1
    %v823 = vperm.slane %v810, 2
    %v824 = vperm.slane %v810, 3
    %v825 = vperm.slane %v810, 4
    %v826 = vperm.slane %v810, 5
    %v827 = vperm.slane %v810, 6
    %v828 = vperm.slane %v810, 7
    %v829 = vrot.slane %v814, 6
    %v830 = vrot.slane %v815, 4
    %v831 = vrot.slane %v816, 2
    %v832 = vrot.slane %v818, 6
    %v833 = vrot.slane %v819, 4
    %v834 = vrot.slane %v820, 2
    %v835 = vrot.slane %v822, 6
    %v836 = vrot.slane %v823, 4
    %v837 = vrot.slane %v824, 2
    %v838 = vrot.slane %v826, 6
    %v839 = vrot.slane %v827, 4
    %v840 = vrot.slane %v828, 2
    %v841 = vsel %vm52, %v813, %v829
    %v842 = vsel %vm54, %v830, %v831
    %v843 = vsel %vm56, %v841, %v842
    %v844 = vsel %vm52, %v817, %v832
    %v845 = vsel %vm54, %v833, %v834
    %v846 = vsel %vm56, %v844, %v845
    %v847 = vsel %vm52, %v821, %v835
    %v848 = vsel %vm54, %v836, %v837
    %v849 = vsel %vm56, %v847, %v848
    %v850 = vsel %vm52, %v825, %v838
    %v851 = vsel %vm54, %v839, %v840
    %v852 = vsel %vm56, %v850, %v851
    %v857 = vmul.f32 %v803, %v843
    %v858 = vmul.f32 %v804, %v846
    %v859 = vmul.f32 %v805, %v849
    %v860 = vmul.f32 %v806, %v852
    %865 = vst [vmem:[#allocation1] ss:$4 sm:$0xff] %v857
    %s866 = scalar_lea.vmem [#allocation1], 32
    %867 = vst [vmem:[%s866] ss:$4 sm:$0xff] %v858
    %v868 = vld.sshfl [vmem:[#allocation1] sm:$0xff pattern:$0x73625140]
    %v869 = vld.sshfl [vmem:[#allocation1 + $0x8] sm:$0xff pattern:$0x73625140]
    %v870 = vld.sshfl [vmem:[#allocation1 + $0x10] sm:$0xff pattern:$0x73625140]
    %v871 = vld.sshfl [vmem:[#allocation1 + $0x18] sm:$0xff pattern:$0x73625140]
    %v872 = vld.sshfl [vmem:[#allocation1 + $0x20] sm:$0xff pattern:$0x73625140]
    %v873 = vld.sshfl [vmem:[#allocation1 + $0x28] sm:$0xff pattern:$0x73625140]
    %v874 = vld.sshfl [vmem:[#allocation1 + $0x30] sm:$0xff pattern:$0x73625140]
    %v875 = vld.sshfl [vmem:[#allocation1 + $0x38] sm:$0xff pattern:$0x73625140]
    %876 = vst [vmem:[#allocation1] ss:$4 sm:$0xff] %v859
    %877 = vst [vmem:[%s866] ss:$4 sm:$0xff] %v860
    %v878 = vld.sshfl [vmem:[#allocation1] sm:$0xff pattern:$0x73625140]
    %v879 = vld.sshfl [vmem:[#allocation1 + $0x8] sm:$0xff pattern:$0x73625140]
    %v880 = vld.sshfl [vmem:[#allocation1 + $0x10] sm:$0xff pattern:$0x73625140]
    %v881 = vld.sshfl [vmem:[#allocation1 + $0x18] sm:$0xff pattern:$0x73625140]
    %v882 = vld.sshfl [vmem:[#allocation1 + $0x20] sm:$0xff pattern:$0x73625140]
    %v883 = vld.sshfl [vmem:[#allocation1 + $0x28] sm:$0xff pattern:$0x73625140]
    %v884 = vld.sshfl [vmem:[#allocation1 + $0x30] sm:$0xff pattern:$0x73625140]
    %v885 = vld.sshfl [vmem:[#allocation1 + $0x38] sm:$0xff pattern:$0x73625140]
    %v902 = vsel %vm52, %v868, 0.0
    %v903 = vsel %vm52, %v869, 0.0
    %v904 = vadd.f32 %v902, %v903
    %v905 = vsel %vm52, %v870, 0.0
    %v906 = vadd.f32 %v904, %v905
    %v907 = vsel %vm52, %v871, 0.0
    %v908 = vadd.f32 %v906, %v907
    %v909 = vsel %vm52, %v872, 0.0
    %v910 = vadd.f32 %v908, %v909
    %v911 = vsel %vm52, %v873, 0.0
    %v912 = vadd.f32 %v910, %v911
    %v913 = vsel %vm52, %v874, 0.0
    %v914 = vadd.f32 %v912, %v913
    %v915 = vsel %vm52, %v875, 0.0
    %v916 = vadd.f32 %v914, %v915
    %v917 = vsel %vm52, %v878, 0.0
    %v918 = vadd.f32 %v916, %v917
    %v919 = vsel %vm52, %v879, 0.0
    %v920 = vadd.f32 %v918, %v919
    %v921 = vsel %vm52, %v880, 0.0
    %v922 = vadd.f32 %v920, %v921
    %v923 = vsel %vm52, %v881, 0.0
    %v924 = vadd.f32 %v922, %v923
    %v925 = vsel %vm52, %v882, 0.0
    %v926 = vadd.f32 %v924, %v925
    %v927 = vsel %vm52, %v883, 0.0
    %v928 = vadd.f32 %v926, %v927
    %v929 = vsel %vm52, %v884, 0.0
    %v930 = vadd.f32 %v928, %v929
    %v931 = vsel %vm52, %v885, 0.0
    %v932 = vadd.f32 %v930, %v931
    %933 = vadd.xlane.f32.xlu0 %v932
    %v934 = vpop.xlane.xlu0 %933
    %v935 = vadd.f32 %v673, %v934
    %s936 = scalar_lea.vmem %s1, 97
    %v937 = vld [vmem:[%s936] ss:$2 sm:$0xff]
    %s938 = scalar_lea.vmem %s1, 113
    %v939 = vld [vmem:[%s938] ss:$2 sm:$0xff]
    %v942 = vperm.slane %v937, 0
    %v943 = vperm.slane %v937, 1
    %v944 = vperm.slane %v937, 2
    %v945 = vperm.slane %v937, 3
    %v946 = vperm.slane %v937, 4
    %v947 = vperm.slane %v937, 5
    %v948 = vperm.slane %v937, 6
    %v949 = vperm.slane %v937, 7
    %v950 = vperm.slane %v939, 0
    %v951 = vperm.slane %v939, 1
    %v952 = vperm.slane %v939, 2
    %v953 = vperm.slane %v939, 3
    %v954 = vperm.slane %v939, 4
    %v955 = vperm.slane %v939, 5
    %v956 = vperm.slane %v939, 6
    %v957 = vperm.slane %v939, 7
    %v958 = vrot.slane %v943, 6
    %v959 = vrot.slane %v944, 4
    %v960 = vrot.slane %v945, 2
    %v961 = vrot.slane %v947, 6
    %v962 = vrot.slane %v948, 4
    %v963 = vrot.slane %v949, 2
    %v964 = vrot.slane %v951, 6
    %v965 = vrot.slane %v952, 4
    %v966 = vrot.slane %v953, 2
    %v967 = vrot.slane %v955, 6
    %v968 = vrot.slane %v956, 4
    %v969 = vrot.slane %v957, 2
    %v970 = vsel %vm52, %v942, %v958
    %v971 = vsel %vm54, %v959, %v960
    %v972 = vsel %vm56, %v970, %v971
    %v973 = vsel %vm52, %v946, %v961
    %v974 = vsel %vm54, %v962, %v963
    %v975 = vsel %vm56, %v973, %v974
    %v976 = vsel %vm52, %v950, %v964
    %v977 = vsel %vm54, %v965, %v966
    %v978 = vsel %vm56, %v976, %v977
    %v979 = vsel %vm52, %v954, %v967
    %v980 = vsel %vm54, %v968, %v969
    %v981 = vsel %vm56, %v979, %v980
    %v986 = vmul.f32 %v803, %v972
    %v987 = vmul.f32 %v804, %v975
    %v988 = vmul.f32 %v805, %v978
    %v989 = vmul.f32 %v806, %v981
    %994 = vst [vmem:[#allocation1] ss:$4 sm:$0xff] %v986
    %s995 = scalar_lea.vmem [#allocation1], 32
    %996 = vst [vmem:[%s995] ss:$4 sm:$0xff] %v987
    %v997 = vld.sshfl [vmem:[#allocation1] sm:$0xff pattern:$0x73625140]
    %v998 = vld.sshfl [vmem:[#allocation1 + $0x8] sm:$0xff pattern:$0x73625140]
    %v999 = vld.sshfl [vmem:[#allocation1 + $0x10] sm:$0xff pattern:$0x73625140]
    %v1000 = vld.sshfl [vmem:[#allocation1 + $0x18] sm:$0xff pattern:$0x73625140]
    %v1001 = vld.sshfl [vmem:[#allocation1 + $0x20] sm:$0xff pattern:$0x73625140]
    %v1002 = vld.sshfl [vmem:[#allocation1 + $0x28] sm:$0xff pattern:$0x73625140]
    %v1003 = vld.sshfl [vmem:[#allocation1 + $0x30] sm:$0xff pattern:$0x73625140]
    %v1004 = vld.sshfl [vmem:[#allocation1 + $0x38] sm:$0xff pattern:$0x73625140]
    %1005 = vst [vmem:[#allocation1] ss:$4 sm:$0xff] %v988
    %1006 = vst [vmem:[%s995] ss:$4 sm:$0xff] %v989
    %v1007 = vld.sshfl [vmem:[#allocation1] sm:$0xff pattern:$0x73625140]
    %v1008 = vld.sshfl [vmem:[#allocation1 + $0x8] sm:$0xff pattern:$0x73625140]
    %v1009 = vld.sshfl [vmem:[#allocation1 + $0x10] sm:$0xff pattern:$0x73625140]
    %v1010 = vld.sshfl [vmem:[#allocation1 + $0x18] sm:$0xff pattern:$0x73625140]
    %v1011 = vld.sshfl [vmem:[#allocation1 + $0x20] sm:$0xff pattern:$0x73625140]
    %v1012 = vld.sshfl [vmem:[#allocation1 + $0x28] sm:$0xff pattern:$0x73625140]
    %v1013 = vld.sshfl [vmem:[#allocation1 + $0x30] sm:$0xff pattern:$0x73625140]
    %v1014 = vld.sshfl [vmem:[#allocation1 + $0x38] sm:$0xff pattern:$0x73625140]
    %v1031 = vsel %vm52, %v997, 0.0
    %v1032 = vsel %vm52, %v998, 0.0
    %v1033 = vadd.f32 %v1031, %v1032
    %v1034 = vsel %vm52, %v999, 0.0
    %v1035 = vadd.f32 %v1033, %v1034
    %v1036 = vsel %vm52, %v1000, 0.0
    %v1037 = vadd.f32 %v1035, %v1036
    %v1038 = vsel %vm52, %v1001, 0.0
    %v1039 = vadd.f32 %v1037, %v1038
    %v1040 = vsel %vm52, %v1002, 0.0
    %v1041 = vadd.f32 %v1039, %v1040
    %v1042 = vsel %vm52, %v1003, 0.0
    %v1043 = vadd.f32 %v1041, %v1042
    %v1044 = vsel %vm52, %v1004, 0.0
    %v1045 = vadd.f32 %v1043, %v1044
    %v1046 = vsel %vm52, %v1007, 0.0
    %v1047 = vadd.f32 %v1045, %v1046
    %v1048 = vsel %vm52, %v1008, 0.0
    %v1049 = vadd.f32 %v1047, %v1048
    %v1050 = vsel %vm52, %v1009, 0.0
    %v1051 = vadd.f32 %v1049, %v1050
    %v1052 = vsel %vm52, %v1010, 0.0
    %v1053 = vadd.f32 %v1051, %v1052
    %v1054 = vsel %vm52, %v1011, 0.0
    %v1055 = vadd.f32 %v1053, %v1054
    %v1056 = vsel %vm52, %v1012, 0.0
    %v1057 = vadd.f32 %v1055, %v1056
    %v1058 = vsel %vm52, %v1013, 0.0
    %v1059 = vadd.f32 %v1057, %v1058
    %v1060 = vsel %vm52, %v1014, 0.0
    %v1061 = vadd.f32 %v1059, %v1060
    %1062 = vadd.xlane.f32.xlu0 %v1061
    %v1063 = vpop.xlane.xlu0 %1062
    %v1064 = vadd.f32 %v802, %v1063
    %v1065 = vld [vmem:[%s0 + $0x80] sm:$0xff]
    %v1066 = vld [vmem:[%s0 + $0x88] sm:$0xff]
    %v1067 = vld [vmem:[%s0 + $0x90] sm:$0xff]
    %v1068 = vld [vmem:[%s0 + $0x98] sm:$0xff]
    %s1069 = scalar_lea.vmem %s1, 128
    %v1070 = vld [vmem:[%s1069] ss:$2 sm:$0xff]
    %s1071 = scalar_lea.vmem %s1, 144
    %v1072 = vld [vmem:[%s1071] ss:$2 sm:$0xff]
    %v1075 = vperm.slane %v1070, 0
    %v1076 = vperm.slane %v1070, 1
    %v1077 = vperm.slane %v1070, 2
    %v1078 = vperm.slane %v1070, 3
    %v1079 = vperm.slane %v1070, 4
    %v1080 = vperm.slane %v1070, 5
    %v1081 = vperm.slane %v1070, 6
    %v1082 = vperm.slane %v1070, 7
    %v1083 = vperm.slane %v1072, 0
    %v1084 = vperm.slane %v1072, 1
    %v1085 = vperm.slane %v1072, 2
    %v1086 = vperm.slane %v1072, 3
    %v1087 = vperm.slane %v1072, 4
    %v1088 = vperm.slane %v1072, 5
    %v1089 = vperm.slane %v1072, 6
    %v1090 = vperm.slane %v1072, 7
    %v1091 = vrot.slane %v1076, 6
    %v1092 = vrot.slane %v1077, 4
    %v1093 = vrot.slane %v1078, 2
    %v1094 = vrot.slane %v1080, 6
    %v1095 = vrot.slane %v1081, 4
    %v1096 = vrot.slane %v1082, 2
    %v1097 = vrot.slane %v1084, 6
    %v1098 = vrot.slane %v1085, 4
    %v1099 = vrot.slane %v1086, 2
    %v1100 = vrot.slane %v1088, 6
    %v1101 = vrot.slane %v1089, 4
    %v1102 = vrot.slane %v1090, 2
    %v1103 = vsel %vm52, %v1075, %v1091
    %v1104 = vsel %vm54, %v1092, %v1093
    %v1105 = vsel %vm56, %v1103, %v1104
    %v1106 = vsel %vm52, %v1079, %v1094
    %v1107 = vsel %vm54, %v1095, %v1096
    %v1108 = vsel %vm56, %v1106, %v1107
    %v1109 = vsel %vm52, %v1083, %v1097
    %v1110 = vsel %vm54, %v1098, %v1099
    %v1111 = vsel %vm56, %v1109, %v1110
    %v1112 = vsel %vm52, %v1087, %v1100
    %v1113 = vsel %vm54, %v1101, %v1102
    %v1114 = vsel %vm56, %v1112, %v1113
    %v1119 = vmul.f32 %v1065, %v1105
    %v1120 = vmul.f32 %v1066, %v1108
    %v1121 = vmul.f32 %v1067, %v1111
    %v1122 = vmul.f32 %v1068, %v1114
    %1127 = vst [vmem:[#allocation1] ss:$4 sm:$0xff] %v1119
    %s1128 = scalar_lea.vmem [#allocation1], 32
    %1129 = vst [vmem:[%s1128] ss:$4 sm:$0xff] %v1120
    %v1130 = vld.sshfl [vmem:[#allocation1] sm:$0xff pattern:$0x73625140]
    %v1131 = vld.sshfl [vmem:[#allocation1 + $0x8] sm:$0xff pattern:$0x73625140]
    %v1132 = vld.sshfl [vmem:[#allocation1 + $0x10] sm:$0xff pattern:$0x73625140]
    %v1133 = vld.sshfl [vmem:[#allocation1 + $0x18] sm:$0xff pattern:$0x73625140]
    %v1134 = vld.sshfl [vmem:[#allocation1 + $0x20] sm:$0xff pattern:$0x73625140]
    %v1135 = vld.sshfl [vmem:[#allocation1 + $0x28] sm:$0xff pattern:$0x73625140]
    %v1136 = vld.sshfl [vmem:[#allocation1 + $0x30] sm:$0xff pattern:$0x73625140]
    %v1137 = vld.sshfl [vmem:[#allocation1 + $0x38] sm:$0xff pattern:$0x73625140]
    %1138 = vst [vmem:[#allocation1] ss:$4 sm:$0xff] %v1121
    %1139 = vst [vmem:[%s1128] ss:$4 sm:$0xff] %v1122
    %v1140 = vld.sshfl [vmem:[#allocation1] sm:$0xff pattern:$0x73625140]
    %v1141 = vld.sshfl [vmem:[#allocation1 + $0x8] sm:$0xff pattern:$0x73625140]
    %v1142 = vld.sshfl [vmem:[#allocation1 + $0x10] sm:$0xff pattern:$0x73625140]
    %v1143 = vld.sshfl [vmem:[#allocation1 + $0x18] sm:$0xff pattern:$0x73625140]
    %v1144 = vld.sshfl [vmem:[#allocation1 + $0x20] sm:$0xff pattern:$0x73625140]
    %v1145 = vld.sshfl [vmem:[#allocation1 + $0x28] sm:$0xff pattern:$0x73625140]
    %v1146 = vld.sshfl [vmem:[#allocation1 + $0x30] sm:$0xff pattern:$0x73625140]
    %v1147 = vld.sshfl [vmem:[#allocation1 + $0x38] sm:$0xff pattern:$0x73625140]
    %v1164 = vsel %vm52, %v1130, 0.0
    %v1165 = vsel %vm52, %v1131, 0.0
    %v1166 = vadd.f32 %v1164, %v1165
    %v1167 = vsel %vm52, %v1132, 0.0
    %v1168 = vadd.f32 %v1166, %v1167
    %v1169 = vsel %vm52, %v1133, 0.0
    %v1170 = vadd.f32 %v1168, %v1169
    %v1171 = vsel %vm52, %v1134, 0.0
    %v1172 = vadd.f32 %v1170, %v1171
    %v1173 = vsel %vm52, %v1135, 0.0
    %v1174 = vadd.f32 %v1172, %v1173
    %v1175 = vsel %vm52, %v1136, 0.0
    %v1176 = vadd.f32 %v1174, %v1175
    %v1177 = vsel %vm52, %v1137, 0.0
    %v1178 = vadd.f32 %v1176, %v1177
    %v1179 = vsel %vm52, %v1140, 0.0
    %v1180 = vadd.f32 %v1178, %v1179
    %v1181 = vsel %vm52, %v1141, 0.0
    %v1182 = vadd.f32 %v1180, %v1181
    %v1183 = vsel %vm52, %v1142, 0.0
    %v1184 = vadd.f32 %v1182, %v1183
    %v1185 = vsel %vm52, %v1143, 0.0
    %v1186 = vadd.f32 %v1184, %v1185
    %v1187 = vsel %vm52, %v1144, 0.0
    %v1188 = vadd.f32 %v1186, %v1187
    %v1189 = vsel %vm52, %v1145, 0.0
    %v1190 = vadd.f32 %v1188, %v1189
    %v1191 = vsel %vm52, %v1146, 0.0
    %v1192 = vadd.f32 %v1190, %v1191
    %v1193 = vsel %vm52, %v1147, 0.0
    %v1194 = vadd.f32 %v1192, %v1193
    %1195 = vadd.xlane.f32.xlu0 %v1194
    %v1196 = vpop.xlane.xlu0 %1195
    %v1197 = vadd.f32 %v935, %v1196
    %s1198 = scalar_lea.vmem %s1, 129
    %v1199 = vld [vmem:[%s1198] ss:$2 sm:$0xff]
    %s1200 = scalar_lea.vmem %s1, 145
    %v1201 = vld [vmem:[%s1200] ss:$2 sm:$0xff]
    %v1204 = vperm.slane %v1199, 0
    %v1205 = vperm.slane %v1199, 1
    %v1206 = vperm.slane %v1199, 2
    %v1207 = vperm.slane %v1199, 3
    %v1208 = vperm.slane %v1199, 4
    %v1209 = vperm.slane %v1199, 5
    %v1210 = vperm.slane %v1199, 6
    %v1211 = vperm.slane %v1199, 7
    %v1212 = vperm.slane %v1201, 0
    %v1213 = vperm.slane %v1201, 1
    %v1214 = vperm.slane %v1201, 2
    %v1215 = vperm.slane %v1201, 3
    %v1216 = vperm.slane %v1201, 4
    %v1217 = vperm.slane %v1201, 5
    %v1218 = vperm.slane %v1201, 6
    %v1219 = vperm.slane %v1201, 7
    %v1220 = vrot.slane %v1205, 6
    %v1221 = vrot.slane %v1206, 4
    %v1222 = vrot.slane %v1207, 2
    %v1223 = vrot.slane %v1209, 6
    %v1224 = vrot.slane %v1210, 4
    %v1225 = vrot.slane %v1211, 2
    %v1226 = vrot.slane %v1213, 6
    %v1227 = vrot.slane %v1214, 4
    %v1228 = vrot.slane %v1215, 2
    %v1229 = vrot.slane %v1217, 6
    %v1230 = vrot.slane %v1218, 4
    %v1231 = vrot.slane %v1219, 2
    %v1232 = vsel %vm52, %v1204, %v1220
    %v1233 = vsel %vm54, %v1221, %v1222
    %v1234 = vsel %vm56, %v1232, %v1233
    %v1235 = vsel %vm52, %v1208, %v1223
    %v1236 = vsel %vm54, %v1224, %v1225
    %v1237 = vsel %vm56, %v1235, %v1236
    %v1238 = vsel %vm52, %v1212, %v1226
    %v1239 = vsel %vm54, %v1227, %v1228
    %v1240 = vsel %vm56, %v1238, %v1239
    %v1241 = vsel %vm52, %v1216, %v1229
    %v1242 = vsel %vm54, %v1230, %v1231
    %v1243 = vsel %vm56, %v1241, %v1242
    %v1248 = vmul.f32 %v1065, %v1234
    %v1249 = vmul.f32 %v1066, %v1237
    %v1250 = vmul.f32 %v1067, %v1240
    %v1251 = vmul.f32 %v1068, %v1243
    %1256 = vst [vmem:[#allocation1] ss:$4 sm:$0xff] %v1248
    %s1257 = scalar_lea.vmem [#allocation1], 32
    %1258 = vst [vmem:[%s1257] ss:$4 sm:$0xff] %v1249
    %v1259 = vld.sshfl [vmem:[#allocation1] sm:$0xff pattern:$0x73625140]
    %v1260 = vld.sshfl [vmem:[#allocation1 + $0x8] sm:$0xff pattern:$0x73625140]
    %v1261 = vld.sshfl [vmem:[#allocation1 + $0x10] sm:$0xff pattern:$0x73625140]
    %v1262 = vld.sshfl [vmem:[#allocation1 + $0x18] sm:$0xff pattern:$0x73625140]
    %v1263 = vld.sshfl [vmem:[#allocation1 + $0x20] sm:$0xff pattern:$0x73625140]
    %v1264 = vld.sshfl [vmem:[#allocation1 + $0x28] sm:$0xff pattern:$0x73625140]
    %v1265 = vld.sshfl [vmem:[#allocation1 + $0x30] sm:$0xff pattern:$0x73625140]
    %v1266 = vld.sshfl [vmem:[#allocation1 + $0x38] sm:$0xff pattern:$0x73625140]
    %1267 = vst [vmem:[#allocation1] ss:$4 sm:$0xff] %v1250
    %1268 = vst [vmem:[%s1257] ss:$4 sm:$0xff] %v1251
    %v1269 = vld.sshfl [vmem:[#allocation1] sm:$0xff pattern:$0x73625140]
    %v1270 = vld.sshfl [vmem:[#allocation1 + $0x8] sm:$0xff pattern:$0x73625140]
    %v1271 = vld.sshfl [vmem:[#allocation1 + $0x10] sm:$0xff pattern:$0x73625140]
    %v1272 = vld.sshfl [vmem:[#allocation1 + $0x18] sm:$0xff pattern:$0x73625140]
    %v1273 = vld.sshfl [vmem:[#allocation1 + $0x20] sm:$0xff pattern:$0x73625140]
    %v1274 = vld.sshfl [vmem:[#allocation1 + $0x28] sm:$0xff pattern:$0x73625140]
    %v1275 = vld.sshfl [vmem:[#allocation1 + $0x30] sm:$0xff pattern:$0x73625140]
    %v1276 = vld.sshfl [vmem:[#allocation1 + $0x38] sm:$0xff pattern:$0x73625140]
    %v1293 = vsel %vm52, %v1259, 0.0
    %v1294 = vsel %vm52, %v1260, 0.0
    %v1295 = vadd.f32 %v1293, %v1294
    %v1296 = vsel %vm52, %v1261, 0.0
    %v1297 = vadd.f32 %v1295, %v1296
    %v1298 = vsel %vm52, %v1262, 0.0
    %v1299 = vadd.f32 %v1297, %v1298
    %v1300 = vsel %vm52, %v1263, 0.0
    %v1301 = vadd.f32 %v1299, %v1300
    %v1302 = vsel %vm52, %v1264, 0.0
    %v1303 = vadd.f32 %v1301, %v1302
    %v1304 = vsel %vm52, %v1265, 0.0
    %v1305 = vadd.f32 %v1303, %v1304
    %v1306 = vsel %vm52, %v1266, 0.0
    %v1307 = vadd.f32 %v1305, %v1306
    %v1308 = vsel %vm52, %v1269, 0.0
    %v1309 = vadd.f32 %v1307, %v1308
    %v1310 = vsel %vm52, %v1270, 0.0
    %v1311 = vadd.f32 %v1309, %v1310
    %v1312 = vsel %vm52, %v1271, 0.0
    %v1313 = vadd.f32 %v1311, %v1312
    %v1314 = vsel %vm52, %v1272, 0.0
    %v1315 = vadd.f32 %v1313, %v1314
    %v1316 = vsel %vm52, %v1273, 0.0
    %v1317 = vadd.f32 %v1315, %v1316
    %v1318 = vsel %vm52, %v1274, 0.0
    %v1319 = vadd.f32 %v1317, %v1318
    %v1320 = vsel %vm52, %v1275, 0.0
    %v1321 = vadd.f32 %v1319, %v1320
    %v1322 = vsel %vm52, %v1276, 0.0
    %v1323 = vadd.f32 %v1321, %v1322
    %1324 = vadd.xlane.f32.xlu0 %v1323
    %v1325 = vpop.xlane.xlu0 %1324
    %v1326 = vadd.f32 %v1064, %v1325
    %v1327 = vld [vmem:[%s0 + $0xa0] sm:$0xff]
    %v1328 = vld [vmem:[%s0 + $0xa8] sm:$0xff]
    %v1329 = vld [vmem:[%s0 + $0xb0] sm:$0xff]
    %v1330 = vld [vmem:[%s0 + $0xb8] sm:$0xff]
    %s1331 = scalar_lea.vmem %s1, 160
    %v1332 = vld [vmem:[%s1331] ss:$2 sm:$0xff]
    %s1333 = scalar_lea.vmem %s1, 176
    %v1334 = vld [vmem:[%s1333] ss:$2 sm:$0xff]
    %v1337 = vperm.slane %v1332, 0
    %v1338 = vperm.slane %v1332, 1
    %v1339 = vperm.slane %v1332, 2
    %v1340 = vperm.slane %v1332, 3
    %v1341 = vperm.slane %v1332, 4
    %v1342 = vperm.slane %v1332, 5
    %v1343 = vperm.slane %v1332, 6
    %v1344 = vperm.slane %v1332, 7
    %v1345 = vperm.slane %v1334, 0
    %v1346 = vperm.slane %v1334, 1
    %v1347 = vperm.slane %v1334, 2
    %v1348 = vperm.slane %v1334, 3
    %v1349 = vperm.slane %v1334, 4
    %v1350 = vperm.slane %v1334, 5
    %v1351 = vperm.slane %v1334, 6
    %v1352 = vperm.slane %v1334, 7
    %v1353 = vrot.slane %v1338, 6
    %v1354 = vrot.slane %v1339, 4
    %v1355 = vrot.slane %v1340, 2
    %v1356 = vrot.slane %v1342, 6
    %v1357 = vrot.slane %v1343, 4
    %v1358 = vrot.slane %v1344, 2
    %v1359 = vrot.slane %v1346, 6
    %v1360 = vrot.slane %v1347, 4
    %v1361 = vrot.slane %v1348, 2
    %v1362 = vrot.slane %v1350, 6
    %v1363 = vrot.slane %v1351, 4
    %v1364 = vrot.slane %v1352, 2
    %v1365 = vsel %vm52, %v1337, %v1353
    %v1366 = vsel %vm54, %v1354, %v1355
    %v1367 = vsel %vm56, %v1365, %v1366
    %v1368 = vsel %vm52, %v1341, %v1356
    %v1369 = vsel %vm54, %v1357, %v1358
    %v1370 = vsel %vm56, %v1368, %v1369
    %v1371 = vsel %vm52, %v1345, %v1359
    %v1372 = vsel %vm54, %v1360, %v1361
    %v1373 = vsel %vm56, %v1371, %v1372
    %v1374 = vsel %vm52, %v1349, %v1362
    %v1375 = vsel %vm54, %v1363, %v1364
    %v1376 = vsel %vm56, %v1374, %v1375
    %v1381 = vmul.f32 %v1327, %v1367
    %v1382 = vmul.f32 %v1328, %v1370
    %v1383 = vmul.f32 %v1329, %v1373
    %v1384 = vmul.f32 %v1330, %v1376
    %1389 = vst [vmem:[#allocation1] ss:$4 sm:$0xff] %v1381
    %s1390 = scalar_lea.vmem [#allocation1], 32
    %1391 = vst [vmem:[%s1390] ss:$4 sm:$0xff] %v1382
    %v1392 = vld.sshfl [vmem:[#allocation1] sm:$0xff pattern:$0x73625140]
    %v1393 = vld.sshfl [vmem:[#allocation1 + $0x8] sm:$0xff pattern:$0x73625140]
    %v1394 = vld.sshfl [vmem:[#allocation1 + $0x10] sm:$0xff pattern:$0x73625140]
    %v1395 = vld.sshfl [vmem:[#allocation1 + $0x18] sm:$0xff pattern:$0x73625140]
    %v1396 = vld.sshfl [vmem:[#allocation1 + $0x20] sm:$0xff pattern:$0x73625140]
    %v1397 = vld.sshfl [vmem:[#allocation1 + $0x28] sm:$0xff pattern:$0x73625140]
    %v1398 = vld.sshfl [vmem:[#allocation1 + $0x30] sm:$0xff pattern:$0x73625140]
    %v1399 = vld.sshfl [vmem:[#allocation1 + $0x38] sm:$0xff pattern:$0x73625140]
    %1400 = vst [vmem:[#allocation1] ss:$4 sm:$0xff] %v1383
    %1401 = vst [vmem:[%s1390] ss:$4 sm:$0xff] %v1384
    %v1402 = vld.sshfl [vmem:[#allocation1] sm:$0xff pattern:$0x73625140]
    %v1403 = vld.sshfl [vmem:[#allocation1 + $0x8] sm:$0xff pattern:$0x73625140]
    %v1404 = vld.sshfl [vmem:[#allocation1 + $0x10] sm:$0xff pattern:$0x73625140]
    %v1405 = vld.sshfl [vmem:[#allocation1 + $0x18] sm:$0xff pattern:$0x73625140]
    %v1406 = vld.sshfl [vmem:[#allocation1 + $0x20] sm:$0xff pattern:$0x73625140]
    %v1407 = vld.sshfl [vmem:[#allocation1 + $0x28] sm:$0xff pattern:$0x73625140]
    %v1408 = vld.sshfl [vmem:[#allocation1 + $0x30] sm:$0xff pattern:$0x73625140]
    %v1409 = vld.sshfl [vmem:[#allocation1 + $0x38] sm:$0xff pattern:$0x73625140]
    %v1426 = vsel %vm52, %v1392, 0.0
    %v1427 = vsel %vm52, %v1393, 0.0
    %v1428 = vadd.f32 %v1426, %v1427
    %v1429 = vsel %vm52, %v1394, 0.0
    %v1430 = vadd.f32 %v1428, %v1429
    %v1431 = vsel %vm52, %v1395, 0.0
    %v1432 = vadd.f32 %v1430, %v1431
    %v1433 = vsel %vm52, %v1396, 0.0
    %v1434 = vadd.f32 %v1432, %v1433
    %v1435 = vsel %vm52, %v1397, 0.0
    %v1436 = vadd.f32 %v1434, %v1435
    %v1437 = vsel %vm52, %v1398, 0.0
    %v1438 = vadd.f32 %v1436, %v1437
    %v1439 = vsel %vm52, %v1399, 0.0
    %v1440 = vadd.f32 %v1438, %v1439
    %v1441 = vsel %vm52, %v1402, 0.0
    %v1442 = vadd.f32 %v1440, %v1441
    %v1443 = vsel %vm52, %v1403, 0.0
    %v1444 = vadd.f32 %v1442, %v1443
    %v1445 = vsel %vm52, %v1404, 0.0
    %v1446 = vadd.f32 %v1444, %v1445
    %v1447 = vsel %vm52, %v1405, 0.0
    %v1448 = vadd.f32 %v1446, %v1447
    %v1449 = vsel %vm52, %v1406, 0.0
    %v1450 = vadd.f32 %v1448, %v1449
    %v1451 = vsel %vm52, %v1407, 0.0
    %v1452 = vadd.f32 %v1450, %v1451
    %v1453 = vsel %vm52, %v1408, 0.0
    %v1454 = vadd.f32 %v1452, %v1453
    %v1455 = vsel %vm52, %v1409, 0.0
    %v1456 = vadd.f32 %v1454, %v1455
    %1457 = vadd.xlane.f32.xlu0 %v1456
    %v1458 = vpop.xlane.xlu0 %1457
    %v1459 = vadd.f32 %v1197, %v1458
    %s1460 = scalar_lea.vmem %s1, 161
    %v1461 = vld [vmem:[%s1460] ss:$2 sm:$0xff]
    %s1462 = scalar_lea.vmem %s1, 177
    %v1463 = vld [vmem:[%s1462] ss:$2 sm:$0xff]
    %v1466 = vperm.slane %v1461, 0
    %v1467 = vperm.slane %v1461, 1
    %v1468 = vperm.slane %v1461, 2
    %v1469 = vperm.slane %v1461, 3
    %v1470 = vperm.slane %v1461, 4
    %v1471 = vperm.slane %v1461, 5
    %v1472 = vperm.slane %v1461, 6
    %v1473 = vperm.slane %v1461, 7
    %v1474 = vperm.slane %v1463, 0
    %v1475 = vperm.slane %v1463, 1
    %v1476 = vperm.slane %v1463, 2
    %v1477 = vperm.slane %v1463, 3
    %v1478 = vperm.slane %v1463, 4
    %v1479 = vperm.slane %v1463, 5
    %v1480 = vperm.slane %v1463, 6
    %v1481 = vperm.slane %v1463, 7
    %v1482 = vrot.slane %v1467, 6
    %v1483 = vrot.slane %v1468, 4
    %v1484 = vrot.slane %v1469, 2
    %v1485 = vrot.slane %v1471, 6
    %v1486 = vrot.slane %v1472, 4
    %v1487 = vrot.slane %v1473, 2
    %v1488 = vrot.slane %v1475, 6
    %v1489 = vrot.slane %v1476, 4
    %v1490 = vrot.slane %v1477, 2
    %v1491 = vrot.slane %v1479, 6
    %v1492 = vrot.slane %v1480, 4
    %v1493 = vrot.slane %v1481, 2
    %v1494 = vsel %vm52, %v1466, %v1482
    %v1495 = vsel %vm54, %v1483, %v1484
    %v1496 = vsel %vm56, %v1494, %v1495
    %v1497 = vsel %vm52, %v1470, %v1485
    %v1498 = vsel %vm54, %v1486, %v1487
    %v1499 = vsel %vm56, %v1497, %v1498
    %v1500 = vsel %vm52, %v1474, %v1488
    %v1501 = vsel %vm54, %v1489, %v1490
    %v1502 = vsel %vm56, %v1500, %v1501
    %v1503 = vsel %vm52, %v1478, %v1491
    %v1504 = vsel %vm54, %v1492, %v1493
    %v1505 = vsel %vm56, %v1503, %v1504
    %v1510 = vmul.f32 %v1327, %v1496
    %v1511 = vmul.f32 %v1328, %v1499
    %v1512 = vmul.f32 %v1329, %v1502
    %v1513 = vmul.f32 %v1330, %v1505
    %1518 = vst [vmem:[#allocation1] ss:$4 sm:$0xff] %v1510
    %s1519 = scalar_lea.vmem [#allocation1], 32
    %1520 = vst [vmem:[%s1519] ss:$4 sm:$0xff] %v1511
    %v1521 = vld.sshfl [vmem:[#allocation1] sm:$0xff pattern:$0x73625140]
    %v1522 = vld.sshfl [vmem:[#allocation1 + $0x8] sm:$0xff pattern:$0x73625140]
    %v1523 = vld.sshfl [vmem:[#allocation1 + $0x10] sm:$0xff pattern:$0x73625140]
    %v1524 = vld.sshfl [vmem:[#allocation1 + $0x18] sm:$0xff pattern:$0x73625140]
    %v1525 = vld.sshfl [vmem:[#allocation1 + $0x20] sm:$0xff pattern:$0x73625140]
    %v1526 = vld.sshfl [vmem:[#allocation1 + $0x28] sm:$0xff pattern:$0x73625140]
    %v1527 = vld.sshfl [vmem:[#allocation1 + $0x30] sm:$0xff pattern:$0x73625140]
    %v1528 = vld.sshfl [vmem:[#allocation1 + $0x38] sm:$0xff pattern:$0x73625140]
    %1529 = vst [vmem:[#allocation1] ss:$4 sm:$0xff] %v1512
    %1530 = vst [vmem:[%s1519] ss:$4 sm:$0xff] %v1513
    %v1531 = vld.sshfl [vmem:[#allocation1] sm:$0xff pattern:$0x73625140]
    %v1532 = vld.sshfl [vmem:[#allocation1 + $0x8] sm:$0xff pattern:$0x73625140]
    %v1533 = vld.sshfl [vmem:[#allocation1 + $0x10] sm:$0xff pattern:$0x73625140]
    %v1534 = vld.sshfl [vmem:[#allocation1 + $0x18] sm:$0xff pattern:$0x73625140]
    %v1535 = vld.sshfl [vmem:[#allocation1 + $0x20] sm:$0xff pattern:$0x73625140]
    %v1536 = vld.sshfl [vmem:[#allocation1 + $0x28] sm:$0xff pattern:$0x73625140]
    %v1537 = vld.sshfl [vmem:[#allocation1 + $0x30] sm:$0xff pattern:$0x73625140]
    %v1538 = vld.sshfl [vmem:[#allocation1 + $0x38] sm:$0xff pattern:$0x73625140]
    %v1555 = vsel %vm52, %v1521, 0.0
    %v1556 = vsel %vm52, %v1522, 0.0
    %v1557 = vadd.f32 %v1555, %v1556
    %v1558 = vsel %vm52, %v1523, 0.0
    %v1559 = vadd.f32 %v1557, %v1558
    %v1560 = vsel %vm52, %v1524, 0.0
    %v1561 = vadd.f32 %v1559, %v1560
    %v1562 = vsel %vm52, %v1525, 0.0
    %v1563 = vadd.f32 %v1561, %v1562
    %v1564 = vsel %vm52, %v1526, 0.0
    %v1565 = vadd.f32 %v1563, %v1564
    %v1566 = vsel %vm52, %v1527, 0.0
    %v1567 = vadd.f32 %v1565, %v1566
    %v1568 = vsel %vm52, %v1528, 0.0
    %v1569 = vadd.f32 %v1567, %v1568
    %v1570 = vsel %vm52, %v1531, 0.0
    %v1571 = vadd.f32 %v1569, %v1570
    %v1572 = vsel %vm52, %v1532, 0.0
    %v1573 = vadd.f32 %v1571, %v1572
    %v1574 = vsel %vm52, %v1533, 0.0
    %v1575 = vadd.f32 %v1573, %v1574
    %v1576 = vsel %vm52, %v1534, 0.0
    %v1577 = vadd.f32 %v1575, %v1576
    %v1578 = vsel %vm52, %v1535, 0.0
    %v1579 = vadd.f32 %v1577, %v1578
    %v1580 = vsel %vm52, %v1536, 0.0
    %v1581 = vadd.f32 %v1579, %v1580
    %v1582 = vsel %vm52, %v1537, 0.0
    %v1583 = vadd.f32 %v1581, %v1582
    %v1584 = vsel %vm52, %v1538, 0.0
    %v1585 = vadd.f32 %v1583, %v1584
    %1586 = vadd.xlane.f32.xlu0 %v1585
    %v1587 = vpop.xlane.xlu0 %1586
    %v1588 = vadd.f32 %v1326, %v1587
    %v1589 = vld [vmem:[%s0 + $0xc0] sm:$0xff]
    %v1590 = vld [vmem:[%s0 + $0xc8] sm:$0xff]
    %v1591 = vld [vmem:[%s0 + $0xd0] sm:$0xff]
    %v1592 = vld [vmem:[%s0 + $0xd8] sm:$0xff]
    %s1593 = scalar_lea.vmem %s1, 192
    %v1594 = vld [vmem:[%s1593] ss:$2 sm:$0xff]
    %s1595 = scalar_lea.vmem %s1, 208
    %v1596 = vld [vmem:[%s1595] ss:$2 sm:$0xff]
    %v1599 = vperm.slane %v1594, 0
    %v1600 = vperm.slane %v1594, 1
    %v1601 = vperm.slane %v1594, 2
    %v1602 = vperm.slane %v1594, 3
    %v1603 = vperm.slane %v1594, 4
    %v1604 = vperm.slane %v1594, 5
    %v1605 = vperm.slane %v1594, 6
    %v1606 = vperm.slane %v1594, 7
    %v1607 = vperm.slane %v1596, 0
    %v1608 = vperm.slane %v1596, 1
    %v1609 = vperm.slane %v1596, 2
    %v1610 = vperm.slane %v1596, 3
    %v1611 = vperm.slane %v1596, 4
    %v1612 = vperm.slane %v1596, 5
    %v1613 = vperm.slane %v1596, 6
    %v1614 = vperm.slane %v1596, 7
    %v1615 = vrot.slane %v1600, 6
    %v1616 = vrot.slane %v1601, 4
    %v1617 = vrot.slane %v1602, 2
    %v1618 = vrot.slane %v1604, 6
    %v1619 = vrot.slane %v1605, 4
    %v1620 = vrot.slane %v1606, 2
    %v1621 = vrot.slane %v1608, 6
    %v1622 = vrot.slane %v1609, 4
    %v1623 = vrot.slane %v1610, 2
    %v1624 = vrot.slane %v1612, 6
    %v1625 = vrot.slane %v1613, 4
    %v1626 = vrot.slane %v1614, 2
    %v1627 = vsel %vm52, %v1599, %v1615
    %v1628 = vsel %vm54, %v1616, %v1617
    %v1629 = vsel %vm56, %v1627, %v1628
    %v1630 = vsel %vm52, %v1603, %v1618
    %v1631 = vsel %vm54, %v1619, %v1620
    %v1632 = vsel %vm56, %v1630, %v1631
    %v1633 = vsel %vm52, %v1607, %v1621
    %v1634 = vsel %vm54, %v1622, %v1623
    %v1635 = vsel %vm56, %v1633, %v1634
    %v1636 = vsel %vm52, %v1611, %v1624
    %v1637 = vsel %vm54, %v1625, %v1626
    %v1638 = vsel %vm56, %v1636, %v1637
    %v1643 = vmul.f32 %v1589, %v1629
    %v1644 = vmul.f32 %v1590, %v1632
    %v1645 = vmul.f32 %v1591, %v1635
    %v1646 = vmul.f32 %v1592, %v1638
    %1651 = vst [vmem:[#allocation1] ss:$4 sm:$0xff] %v1643
    %s1652 = scalar_lea.vmem [#allocation1], 32
    %1653 = vst [vmem:[%s1652] ss:$4 sm:$0xff] %v1644
    %v1654 = vld.sshfl [vmem:[#allocation1] sm:$0xff pattern:$0x73625140]
    %v1655 = vld.sshfl [vmem:[#allocation1 + $0x8] sm:$0xff pattern:$0x73625140]
    %v1656 = vld.sshfl [vmem:[#allocation1 + $0x10] sm:$0xff pattern:$0x73625140]
    %v1657 = vld.sshfl [vmem:[#allocation1 + $0x18] sm:$0xff pattern:$0x73625140]
    %v1658 = vld.sshfl [vmem:[#allocation1 + $0x20] sm:$0xff pattern:$0x73625140]
    %v1659 = vld.sshfl [vmem:[#allocation1 + $0x28] sm:$0xff pattern:$0x73625140]
    %v1660 = vld.sshfl [vmem:[#allocation1 + $0x30] sm:$0xff pattern:$0x73625140]
    %v1661 = vld.sshfl [vmem:[#allocation1 + $0x38] sm:$0xff pattern:$0x73625140]
    %1662 = vst [vmem:[#allocation1] ss:$4 sm:$0xff] %v1645
    %1663 = vst [vmem:[%s1652] ss:$4 sm:$0xff] %v1646
    %v1664 = vld.sshfl [vmem:[#allocation1] sm:$0xff pattern:$0x73625140]
    %v1665 = vld.sshfl [vmem:[#allocation1 + $0x8] sm:$0xff pattern:$0x73625140]
    %v1666 = vld.sshfl [vmem:[#allocation1 + $0x10] sm:$0xff pattern:$0x73625140]
    %v1667 = vld.sshfl [vmem:[#allocation1 + $0x18] sm:$0xff pattern:$0x73625140]
    %v1668 = vld.sshfl [vmem:[#allocation1 + $0x20] sm:$0xff pattern:$0x73625140]
    %v1669 = vld.sshfl [vmem:[#allocation1 + $0x28] sm:$0xff pattern:$0x73625140]
    %v1670 = vld.sshfl [vmem:[#allocation1 + $0x30] sm:$0xff pattern:$0x73625140]
    %v1671 = vld.sshfl [vmem:[#allocation1 + $0x38] sm:$0xff pattern:$0x73625140]
    %v1688 = vsel %vm52, %v1654, 0.0
    %v1689 = vsel %vm52, %v1655, 0.0
    %v1690 = vadd.f32 %v1688, %v1689
    %v1691 = vsel %vm52, %v1656, 0.0
    %v1692 = vadd.f32 %v1690, %v1691
    %v1693 = vsel %vm52, %v1657, 0.0
    %v1694 = vadd.f32 %v1692, %v1693
    %v1695 = vsel %vm52, %v1658, 0.0
    %v1696 = vadd.f32 %v1694, %v1695
    %v1697 = vsel %vm52, %v1659, 0.0
    %v1698 = vadd.f32 %v1696, %v1697
    %v1699 = vsel %vm52, %v1660, 0.0
    %v1700 = vadd.f32 %v1698, %v1699
    %v1701 = vsel %vm52, %v1661, 0.0
    %v1702 = vadd.f32 %v1700, %v1701
    %v1703 = vsel %vm52, %v1664, 0.0
    %v1704 = vadd.f32 %v1702, %v1703
    %v1705 = vsel %vm52, %v1665, 0.0
    %v1706 = vadd.f32 %v1704, %v1705
    %v1707 = vsel %vm52, %v1666, 0.0
    %v1708 = vadd.f32 %v1706, %v1707
    %v1709 = vsel %vm52, %v1667, 0.0
    %v1710 = vadd.f32 %v1708, %v1709
    %v1711 = vsel %vm52, %v1668, 0.0
    %v1712 = vadd.f32 %v1710, %v1711
    %v1713 = vsel %vm52, %v1669, 0.0
    %v1714 = vadd.f32 %v1712, %v1713
    %v1715 = vsel %vm52, %v1670, 0.0
    %v1716 = vadd.f32 %v1714, %v1715
    %v1717 = vsel %vm52, %v1671, 0.0
    %v1718 = vadd.f32 %v1716, %v1717
    %1719 = vadd.xlane.f32.xlu0 %v1718
    %v1720 = vpop.xlane.xlu0 %1719
    %v1721 = vadd.f32 %v1459, %v1720
    %s1722 = scalar_lea.vmem %s1, 193
    %v1723 = vld [vmem:[%s1722] ss:$2 sm:$0xff]
    %s1724 = scalar_lea.vmem %s1, 209
    %v1725 = vld [vmem:[%s1724] ss:$2 sm:$0xff]
    %v1728 = vperm.slane %v1723, 0
    %v1729 = vperm.slane %v1723, 1
    %v1730 = vperm.slane %v1723, 2
    %v1731 = vperm.slane %v1723, 3
    %v1732 = vperm.slane %v1723, 4
    %v1733 = vperm.slane %v1723, 5
    %v1734 = vperm.slane %v1723, 6
    %v1735 = vperm.slane %v1723, 7
    %v1736 = vperm.slane %v1725, 0
    %v1737 = vperm.slane %v1725, 1
    %v1738 = vperm.slane %v1725, 2
    %v1739 = vperm.slane %v1725, 3
    %v1740 = vperm.slane %v1725, 4
    %v1741 = vperm.slane %v1725, 5
    %v1742 = vperm.slane %v1725, 6
    %v1743 = vperm.slane %v1725, 7
    %v1744 = vrot.slane %v1729, 6
    %v1745 = vrot.slane %v1730, 4
    %v1746 = vrot.slane %v1731, 2
    %v1747 = vrot.slane %v1733, 6
    %v1748 = vrot.slane %v1734, 4
    %v1749 = vrot.slane %v1735, 2
    %v1750 = vrot.slane %v1737, 6
    %v1751 = vrot.slane %v1738, 4
    %v1752 = vrot.slane %v1739, 2
    %v1753 = vrot.slane %v1741, 6
    %v1754 = vrot.slane %v1742, 4
    %v1755 = vrot.slane %v1743, 2
    %v1756 = vsel %vm52, %v1728, %v1744
    %v1757 = vsel %vm54, %v1745, %v1746
    %v1758 = vsel %vm56, %v1756, %v1757
    %v1759 = vsel %vm52, %v1732, %v1747
    %v1760 = vsel %vm54, %v1748, %v1749
    %v1761 = vsel %vm56, %v1759, %v1760
    %v1762 = vsel %vm52, %v1736, %v1750
    %v1763 = vsel %vm54, %v1751, %v1752
    %v1764 = vsel %vm56, %v1762, %v1763
    %v1765 = vsel %vm52, %v1740, %v1753
    %v1766 = vsel %vm54, %v1754, %v1755
    %v1767 = vsel %vm56, %v1765, %v1766
    %v1772 = vmul.f32 %v1589, %v1758
    %v1773 = vmul.f32 %v1590, %v1761
    %v1774 = vmul.f32 %v1591, %v1764
    %v1775 = vmul.f32 %v1592, %v1767
    %1780 = vst [vmem:[#allocation1] ss:$4 sm:$0xff] %v1772
    %s1781 = scalar_lea.vmem [#allocation1], 32
    %1782 = vst [vmem:[%s1781] ss:$4 sm:$0xff] %v1773
    %v1783 = vld.sshfl [vmem:[#allocation1] sm:$0xff pattern:$0x73625140]
    %v1784 = vld.sshfl [vmem:[#allocation1 + $0x8] sm:$0xff pattern:$0x73625140]
    %v1785 = vld.sshfl [vmem:[#allocation1 + $0x10] sm:$0xff pattern:$0x73625140]
    %v1786 = vld.sshfl [vmem:[#allocation1 + $0x18] sm:$0xff pattern:$0x73625140]
    %v1787 = vld.sshfl [vmem:[#allocation1 + $0x20] sm:$0xff pattern:$0x73625140]
    %v1788 = vld.sshfl [vmem:[#allocation1 + $0x28] sm:$0xff pattern:$0x73625140]
    %v1789 = vld.sshfl [vmem:[#allocation1 + $0x30] sm:$0xff pattern:$0x73625140]
    %v1790 = vld.sshfl [vmem:[#allocation1 + $0x38] sm:$0xff pattern:$0x73625140]
    %1791 = vst [vmem:[#allocation1] ss:$4 sm:$0xff] %v1774
    %1792 = vst [vmem:[%s1781] ss:$4 sm:$0xff] %v1775
    %v1793 = vld.sshfl [vmem:[#allocation1] sm:$0xff pattern:$0x73625140]
    %v1794 = vld.sshfl [vmem:[#allocation1 + $0x8] sm:$0xff pattern:$0x73625140]
    %v1795 = vld.sshfl [vmem:[#allocation1 + $0x10] sm:$0xff pattern:$0x73625140]
    %v1796 = vld.sshfl [vmem:[#allocation1 + $0x18] sm:$0xff pattern:$0x73625140]
    %v1797 = vld.sshfl [vmem:[#allocation1 + $0x20] sm:$0xff pattern:$0x73625140]
    %v1798 = vld.sshfl [vmem:[#allocation1 + $0x28] sm:$0xff pattern:$0x73625140]
    %v1799 = vld.sshfl [vmem:[#allocation1 + $0x30] sm:$0xff pattern:$0x73625140]
    %v1800 = vld.sshfl [vmem:[#allocation1 + $0x38] sm:$0xff pattern:$0x73625140]
    %v1817 = vsel %vm52, %v1783, 0.0
    %v1818 = vsel %vm52, %v1784, 0.0
    %v1819 = vadd.f32 %v1817, %v1818
    %v1820 = vsel %vm52, %v1785, 0.0
    %v1821 = vadd.f32 %v1819, %v1820
    %v1822 = vsel %vm52, %v1786, 0.0
    %v1823 = vadd.f32 %v1821, %v1822
    %v1824 = vsel %vm52, %v1787, 0.0
    %v1825 = vadd.f32 %v1823, %v1824
    %v1826 = vsel %vm52, %v1788, 0.0
    %v1827 = vadd.f32 %v1825, %v1826
    %v1828 = vsel %vm52, %v1789, 0.0
    %v1829 = vadd.f32 %v1827, %v1828
    %v1830 = vsel %vm52, %v1790, 0.0
    %v1831 = vadd.f32 %v1829, %v1830
    %v1832 = vsel %vm52, %v1793, 0.0
    %v1833 = vadd.f32 %v1831, %v1832
    %v1834 = vsel %vm52, %v1794, 0.0
    %v1835 = vadd.f32 %v1833, %v1834
    %v1836 = vsel %vm52, %v1795, 0.0
    %v1837 = vadd.f32 %v1835, %v1836
    %v1838 = vsel %vm52, %v1796, 0.0
    %v1839 = vadd.f32 %v1837, %v1838
    %v1840 = vsel %vm52, %v1797, 0.0
    %v1841 = vadd.f32 %v1839, %v1840
    %v1842 = vsel %vm52, %v1798, 0.0
    %v1843 = vadd.f32 %v1841, %v1842
    %v1844 = vsel %vm52, %v1799, 0.0
    %v1845 = vadd.f32 %v1843, %v1844
    %v1846 = vsel %vm52, %v1800, 0.0
    %v1847 = vadd.f32 %v1845, %v1846
    %1848 = vadd.xlane.f32.xlu0 %v1847
    %v1849 = vpop.xlane.xlu0 %1848
    %v1850 = vadd.f32 %v1588, %v1849
    %v1851 = vld [vmem:[%s0 + $0xe0] sm:$0xff]
    %v1852 = vld [vmem:[%s0 + $0xe8] sm:$0xff]
    %v1853 = vld [vmem:[%s0 + $0xf0] sm:$0xff]
    %v1854 = vld [vmem:[%s0 + $0xf8] sm:$0xff]
    %s1855 = scalar_lea.vmem %s1, 224
    %v1856 = vld [vmem:[%s1855] ss:$2 sm:$0xff]
    %s1857 = scalar_lea.vmem %s1, 240
    %v1858 = vld [vmem:[%s1857] ss:$2 sm:$0xff]
    %v1861 = vperm.slane %v1856, 0
    %v1862 = vperm.slane %v1856, 1
    %v1863 = vperm.slane %v1856, 2
    %v1864 = vperm.slane %v1856, 3
    %v1865 = vperm.slane %v1856, 4
    %v1866 = vperm.slane %v1856, 5
    %v1867 = vperm.slane %v1856, 6
    %v1868 = vperm.slane %v1856, 7
    %v1869 = vperm.slane %v1858, 0
    %v1870 = vperm.slane %v1858, 1
    %v1871 = vperm.slane %v1858, 2
    %v1872 = vperm.slane %v1858, 3
    %v1873 = vperm.slane %v1858, 4
    %v1874 = vperm.slane %v1858, 5
    %v1875 = vperm.slane %v1858, 6
    %v1876 = vperm.slane %v1858, 7
    %v1877 = vrot.slane %v1862, 6
    %v1878 = vrot.slane %v1863, 4
    %v1879 = vrot.slane %v1864, 2
    %v1880 = vrot.slane %v1866, 6
    %v1881 = vrot.slane %v1867, 4
    %v1882 = vrot.slane %v1868, 2
    %v1883 = vrot.slane %v1870, 6
    %v1884 = vrot.slane %v1871, 4
    %v1885 = vrot.slane %v1872, 2
    %v1886 = vrot.slane %v1874, 6
    %v1887 = vrot.slane %v1875, 4
    %v1888 = vrot.slane %v1876, 2
    %v1889 = vsel %vm52, %v1861, %v1877
    %v1890 = vsel %vm54, %v1878, %v1879
    %v1891 = vsel %vm56, %v1889, %v1890
    %v1892 = vsel %vm52, %v1865, %v1880
    %v1893 = vsel %vm54, %v1881, %v1882
    %v1894 = vsel %vm56, %v1892, %v1893
    %v1895 = vsel %vm52, %v1869, %v1883
    %v1896 = vsel %vm54, %v1884, %v1885
    %v1897 = vsel %vm56, %v1895, %v1896
    %v1898 = vsel %vm52, %v1873, %v1886
    %v1899 = vsel %vm54, %v1887, %v1888
    %v1900 = vsel %vm56, %v1898, %v1899
    %v1905 = vmul.f32 %v1851, %v1891
    %v1906 = vmul.f32 %v1852, %v1894
    %v1907 = vmul.f32 %v1853, %v1897
    %v1908 = vmul.f32 %v1854, %v1900
    %1913 = vst [vmem:[#allocation1] ss:$4 sm:$0xff] %v1905
    %s1914 = scalar_lea.vmem [#allocation1], 32
    %1915 = vst [vmem:[%s1914] ss:$4 sm:$0xff] %v1906
    %v1916 = vld.sshfl [vmem:[#allocation1] sm:$0xff pattern:$0x73625140]
    %v1917 = vld.sshfl [vmem:[#allocation1 + $0x8] sm:$0xff pattern:$0x73625140]
    %v1918 = vld.sshfl [vmem:[#allocation1 + $0x10] sm:$0xff pattern:$0x73625140]
    %v1919 = vld.sshfl [vmem:[#allocation1 + $0x18] sm:$0xff pattern:$0x73625140]
    %v1920 = vld.sshfl [vmem:[#allocation1 + $0x20] sm:$0xff pattern:$0x73625140]
    %v1921 = vld.sshfl [vmem:[#allocation1 + $0x28] sm:$0xff pattern:$0x73625140]
    %v1922 = vld.sshfl [vmem:[#allocation1 + $0x30] sm:$0xff pattern:$0x73625140]
    %v1923 = vld.sshfl [vmem:[#allocation1 + $0x38] sm:$0xff pattern:$0x73625140]
    %1924 = vst [vmem:[#allocation1] ss:$4 sm:$0xff] %v1907
    %1925 = vst [vmem:[%s1914] ss:$4 sm:$0xff] %v1908
    %v1926 = vld.sshfl [vmem:[#allocation1] sm:$0xff pattern:$0x73625140]
    %v1927 = vld.sshfl [vmem:[#allocation1 + $0x8] sm:$0xff pattern:$0x73625140]
    %v1928 = vld.sshfl [vmem:[#allocation1 + $0x10] sm:$0xff pattern:$0x73625140]
    %v1929 = vld.sshfl [vmem:[#allocation1 + $0x18] sm:$0xff pattern:$0x73625140]
    %v1930 = vld.sshfl [vmem:[#allocation1 + $0x20] sm:$0xff pattern:$0x73625140]
    %v1931 = vld.sshfl [vmem:[#allocation1 + $0x28] sm:$0xff pattern:$0x73625140]
    %v1932 = vld.sshfl [vmem:[#allocation1 + $0x30] sm:$0xff pattern:$0x73625140]
    %v1933 = vld.sshfl [vmem:[#allocation1 + $0x38] sm:$0xff pattern:$0x73625140]
    %v1950 = vsel %vm52, %v1916, 0.0
    %v1951 = vsel %vm52, %v1917, 0.0
    %v1952 = vadd.f32 %v1950, %v1951
    %v1953 = vsel %vm52, %v1918, 0.0
    %v1954 = vadd.f32 %v1952, %v1953
    %v1955 = vsel %vm52, %v1919, 0.0
    %v1956 = vadd.f32 %v1954, %v1955
    %v1957 = vsel %vm52, %v1920, 0.0
    %v1958 = vadd.f32 %v1956, %v1957
    %v1959 = vsel %vm52, %v1921, 0.0
    %v1960 = vadd.f32 %v1958, %v1959
    %v1961 = vsel %vm52, %v1922, 0.0
    %v1962 = vadd.f32 %v1960, %v1961
    %v1963 = vsel %vm52, %v1923, 0.0
    %v1964 = vadd.f32 %v1962, %v1963
    %v1965 = vsel %vm52, %v1926, 0.0
    %v1966 = vadd.f32 %v1964, %v1965
    %v1967 = vsel %vm52, %v1927, 0.0
    %v1968 = vadd.f32 %v1966, %v1967
    %v1969 = vsel %vm52, %v1928, 0.0
    %v1970 = vadd.f32 %v1968, %v1969
    %v1971 = vsel %vm52, %v1929, 0.0
    %v1972 = vadd.f32 %v1970, %v1971
    %v1973 = vsel %vm52, %v1930, 0.0
    %v1974 = vadd.f32 %v1972, %v1973
    %v1975 = vsel %vm52, %v1931, 0.0
    %v1976 = vadd.f32 %v1974, %v1975
    %v1977 = vsel %vm52, %v1932, 0.0
    %v1978 = vadd.f32 %v1976, %v1977
    %v1979 = vsel %vm52, %v1933, 0.0
    %v1980 = vadd.f32 %v1978, %v1979
    %1981 = vadd.xlane.f32.xlu0 %v1980
    %v1982 = vpop.xlane.xlu0 %1981
    %v1983 = vadd.f32 %v1721, %v1982
    %s1984 = scalar_lea.vmem %s1, 225
    %v1985 = vld [vmem:[%s1984] ss:$2 sm:$0xff]
    %s1986 = scalar_lea.vmem %s1, 241
    %v1987 = vld [vmem:[%s1986] ss:$2 sm:$0xff]
    %v1990 = vperm.slane %v1985, 0
    %v1991 = vperm.slane %v1985, 1
    %v1992 = vperm.slane %v1985, 2
    %v1993 = vperm.slane %v1985, 3
    %v1994 = vperm.slane %v1985, 4
    %v1995 = vperm.slane %v1985, 5
    %v1996 = vperm.slane %v1985, 6
    %v1997 = vperm.slane %v1985, 7
    %v1998 = vperm.slane %v1987, 0
    %v1999 = vperm.slane %v1987, 1
    %v2000 = vperm.slane %v1987, 2
    %v2001 = vperm.slane %v1987, 3
    %v2002 = vperm.slane %v1987, 4
    %v2003 = vperm.slane %v1987, 5
    %v2004 = vperm.slane %v1987, 6
    %v2005 = vperm.slane %v1987, 7
    %v2006 = vrot.slane %v1991, 6
    %v2007 = vrot.slane %v1992, 4
    %v2008 = vrot.slane %v1993, 2
    %v2009 = vrot.slane %v1995, 6
    %v2010 = vrot.slane %v1996, 4
    %v2011 = vrot.slane %v1997, 2
    %v2012 = vrot.slane %v1999, 6
    %v2013 = vrot.slane %v2000, 4
    %v2014 = vrot.slane %v2001, 2
    %v2015 = vrot.slane %v2003, 6
    %v2016 = vrot.slane %v2004, 4
    %v2017 = vrot.slane %v2005, 2
    %v2018 = vsel %vm52, %v1990, %v2006
    %v2019 = vsel %vm54, %v2007, %v2008
    %v2020 = vsel %vm56, %v2018, %v2019
    %v2021 = vsel %vm52, %v1994, %v2009
    %v2022 = vsel %vm54, %v2010, %v2011
    %v2023 = vsel %vm56, %v2021, %v2022
    %v2024 = vsel %vm52, %v1998, %v2012
    %v2025 = vsel %vm54, %v2013, %v2014
    %v2026 = vsel %vm56, %v2024, %v2025
    %v2027 = vsel %vm52, %v2002, %v2015
    %v2028 = vsel %vm54, %v2016, %v2017
    %v2029 = vsel %vm56, %v2027, %v2028
    %v2034 = vmul.f32 %v1851, %v2020
    %v2035 = vmul.f32 %v1852, %v2023
    %v2036 = vmul.f32 %v1853, %v2026
    %v2037 = vmul.f32 %v1854, %v2029
    %2042 = vst [vmem:[#allocation1] ss:$4 sm:$0xff] %v2034
    %s2043 = scalar_lea.vmem [#allocation1], 32
    %2044 = vst [vmem:[%s2043] ss:$4 sm:$0xff] %v2035
    %v2045 = vld.sshfl [vmem:[#allocation1] sm:$0xff pattern:$0x73625140]
    %v2046 = vld.sshfl [vmem:[#allocation1 + $0x8] sm:$0xff pattern:$0x73625140]
    %v2047 = vld.sshfl [vmem:[#allocation1 + $0x10] sm:$0xff pattern:$0x73625140]
    %v2048 = vld.sshfl [vmem:[#allocation1 + $0x18] sm:$0xff pattern:$0x73625140]
    %v2049 = vld.sshfl [vmem:[#allocation1 + $0x20] sm:$0xff pattern:$0x73625140]
    %v2050 = vld.sshfl [vmem:[#allocation1 + $0x28] sm:$0xff pattern:$0x73625140]
    %v2051 = vld.sshfl [vmem:[#allocation1 + $0x30] sm:$0xff pattern:$0x73625140]
    %v2052 = vld.sshfl [vmem:[#allocation1 + $0x38] sm:$0xff pattern:$0x73625140]
    %2053 = vst [vmem:[#allocation1] ss:$4 sm:$0xff] %v2036
    %2054 = vst [vmem:[%s2043] ss:$4 sm:$0xff] %v2037
    %v2055 = vld.sshfl [vmem:[#allocation1] sm:$0xff pattern:$0x73625140]
    %v2056 = vld.sshfl [vmem:[#allocation1 + $0x8] sm:$0xff pattern:$0x73625140]
    %v2057 = vld.sshfl [vmem:[#allocation1 + $0x10] sm:$0xff pattern:$0x73625140]
    %v2058 = vld.sshfl [vmem:[#allocation1 + $0x18] sm:$0xff pattern:$0x73625140]
    %v2059 = vld.sshfl [vmem:[#allocation1 + $0x20] sm:$0xff pattern:$0x73625140]
    %v2060 = vld.sshfl [vmem:[#allocation1 + $0x28] sm:$0xff pattern:$0x73625140]
    %v2061 = vld.sshfl [vmem:[#allocation1 + $0x30] sm:$0xff pattern:$0x73625140]
    %v2062 = vld.sshfl [vmem:[#allocation1 + $0x38] sm:$0xff pattern:$0x73625140]
    %v2079 = vsel %vm52, %v2045, 0.0
    %v2080 = vsel %vm52, %v2046, 0.0
    %v2081 = vadd.f32 %v2079, %v2080
    %v2082 = vsel %vm52, %v2047, 0.0
    %v2083 = vadd.f32 %v2081, %v2082
    %v2084 = vsel %vm52, %v2048, 0.0
    %v2085 = vadd.f32 %v2083, %v2084
    %v2086 = vsel %vm52, %v2049, 0.0
    %v2087 = vadd.f32 %v2085, %v2086
    %v2088 = vsel %vm52, %v2050, 0.0
    %v2089 = vadd.f32 %v2087, %v2088
    %v2090 = vsel %vm52, %v2051, 0.0
    %v2091 = vadd.f32 %v2089, %v2090
    %v2092 = vsel %vm52, %v2052, 0.0
    %v2093 = vadd.f32 %v2091, %v2092
    %v2094 = vsel %vm52, %v2055, 0.0
    %v2095 = vadd.f32 %v2093, %v2094
    %v2096 = vsel %vm52, %v2056, 0.0
    %v2097 = vadd.f32 %v2095, %v2096
    %v2098 = vsel %vm52, %v2057, 0.0
    %v2099 = vadd.f32 %v2097, %v2098
    %v2100 = vsel %vm52, %v2058, 0.0
    %v2101 = vadd.f32 %v2099, %v2100
    %v2102 = vsel %vm52, %v2059, 0.0
    %v2103 = vadd.f32 %v2101, %v2102
    %v2104 = vsel %vm52, %v2060, 0.0
    %v2105 = vadd.f32 %v2103, %v2104
    %v2106 = vsel %vm52, %v2061, 0.0
    %v2107 = vadd.f32 %v2105, %v2106
    %v2108 = vsel %vm52, %v2062, 0.0
    %v2109 = vadd.f32 %v2107, %v2108
    %2110 = vadd.xlane.f32.xlu0 %v2109
    %v2111 = vpop.xlane.xlu0 %2110
    %v2112 = vadd.f32 %v1850, %v2111
    %v2113 = vld [vmem:[%s0 + $0x100] sm:$0xff]
    %v2114 = vld [vmem:[%s0 + $0x108] sm:$0xff]
    %v2115 = vld [vmem:[%s0 + $0x110] sm:$0xff]
    %v2116 = vld [vmem:[%s0 + $0x118] sm:$0xff]
    %s2117 = scalar_lea.vmem %s1, 256
    %v2118 = vld [vmem:[%s2117] ss:$2 sm:$0xff]
    %s2119 = scalar_lea.vmem %s1, 272
    %v2120 = vld [vmem:[%s2119] ss:$2 sm:$0xff]
    %v2123 = vperm.slane %v2118, 0
    %v2124 = vperm.slane %v2118, 1
    %v2125 = vperm.slane %v2118, 2
    %v2126 = vperm.slane %v2118, 3
    %v2127 = vperm.slane %v2118, 4
    %v2128 = vperm.slane %v2118, 5
    %v2129 = vperm.slane %v2118, 6
    %v2130 = vperm.slane %v2118, 7
    %v2131 = vperm.slane %v2120, 0
    %v2132 = vperm.slane %v2120, 1
    %v2133 = vperm.slane %v2120, 2
    %v2134 = vperm.slane %v2120, 3
    %v2135 = vperm.slane %v2120, 4
    %v2136 = vperm.slane %v2120, 5
    %v2137 = vperm.slane %v2120, 6
    %v2138 = vperm.slane %v2120, 7
    %v2139 = vrot.slane %v2124, 6
    %v2140 = vrot.slane %v2125, 4
    %v2141 = vrot.slane %v2126, 2
    %v2142 = vrot.slane %v2128, 6
    %v2143 = vrot.slane %v2129, 4
    %v2144 = vrot.slane %v2130, 2
    %v2145 = vrot.slane %v2132, 6
    %v2146 = vrot.slane %v2133, 4
    %v2147 = vrot.slane %v2134, 2
    %v2148 = vrot.slane %v2136, 6
    %v2149 = vrot.slane %v2137, 4
    %v2150 = vrot.slane %v2138, 2
    %v2151 = vsel %vm52, %v2123, %v2139
    %v2152 = vsel %vm54, %v2140, %v2141
    %v2153 = vsel %vm56, %v2151, %v2152
    %v2154 = vsel %vm52, %v2127, %v2142
    %v2155 = vsel %vm54, %v2143, %v2144
    %v2156 = vsel %vm56, %v2154, %v2155
    %v2157 = vsel %vm52, %v2131, %v2145
    %v2158 = vsel %vm54, %v2146, %v2147
    %v2159 = vsel %vm56, %v2157, %v2158
    %v2160 = vsel %vm52, %v2135, %v2148
    %v2161 = vsel %vm54, %v2149, %v2150
    %v2162 = vsel %vm56, %v2160, %v2161
    %v2167 = vmul.f32 %v2113, %v2153
    %v2168 = vmul.f32 %v2114, %v2156
    %v2169 = vmul.f32 %v2115, %v2159
    %v2170 = vmul.f32 %v2116, %v2162
    %2175 = vst [vmem:[#allocation1] ss:$4 sm:$0xff] %v2167
    %s2176 = scalar_lea.vmem [#allocation1], 32
    %2177 = vst [vmem:[%s2176] ss:$4 sm:$0xff] %v2168
    %v2178 = vld.sshfl [vmem:[#allocation1] sm:$0xff pattern:$0x73625140]
    %v2179 = vld.sshfl [vmem:[#allocation1 + $0x8] sm:$0xff pattern:$0x73625140]
    %v2180 = vld.sshfl [vmem:[#allocation1 + $0x10] sm:$0xff pattern:$0x73625140]
    %v2181 = vld.sshfl [vmem:[#allocation1 + $0x18] sm:$0xff pattern:$0x73625140]
    %v2182 = vld.sshfl [vmem:[#allocation1 + $0x20] sm:$0xff pattern:$0x73625140]
    %v2183 = vld.sshfl [vmem:[#allocation1 + $0x28] sm:$0xff pattern:$0x73625140]
    %v2184 = vld.sshfl [vmem:[#allocation1 + $0x30] sm:$0xff pattern:$0x73625140]
    %v2185 = vld.sshfl [vmem:[#allocation1 + $0x38] sm:$0xff pattern:$0x73625140]
    %2186 = vst [vmem:[#allocation1] ss:$4 sm:$0xff] %v2169
    %2187 = vst [vmem:[%s2176] ss:$4 sm:$0xff] %v2170
    %v2188 = vld.sshfl [vmem:[#allocation1] sm:$0xff pattern:$0x73625140]
    %v2189 = vld.sshfl [vmem:[#allocation1 + $0x8] sm:$0xff pattern:$0x73625140]
    %v2190 = vld.sshfl [vmem:[#allocation1 + $0x10] sm:$0xff pattern:$0x73625140]
    %v2191 = vld.sshfl [vmem:[#allocation1 + $0x18] sm:$0xff pattern:$0x73625140]
    %v2192 = vld.sshfl [vmem:[#allocation1 + $0x20] sm:$0xff pattern:$0x73625140]
    %v2193 = vld.sshfl [vmem:[#allocation1 + $0x28] sm:$0xff pattern:$0x73625140]
    %v2194 = vld.sshfl [vmem:[#allocation1 + $0x30] sm:$0xff pattern:$0x73625140]
    %v2195 = vld.sshfl [vmem:[#allocation1 + $0x38] sm:$0xff pattern:$0x73625140]
    %v2212 = vsel %vm52, %v2178, 0.0
    %v2213 = vsel %vm52, %v2179, 0.0
    %v2214 = vadd.f32 %v2212, %v2213
    %v2215 = vsel %vm52, %v2180, 0.0
    %v2216 = vadd.f32 %v2214, %v2215
    %v2217 = vsel %vm52, %v2181, 0.0
    %v2218 = vadd.f32 %v2216, %v2217
    %v2219 = vsel %vm52, %v2182, 0.0
    %v2220 = vadd.f32 %v2218, %v2219
    %v2221 = vsel %vm52, %v2183, 0.0
    %v2222 = vadd.f32 %v2220, %v2221
    %v2223 = vsel %vm52, %v2184, 0.0
    %v2224 = vadd.f32 %v2222, %v2223
    %v2225 = vsel %vm52, %v2185, 0.0
    %v2226 = vadd.f32 %v2224, %v2225
    %v2227 = vsel %vm52, %v2188, 0.0
    %v2228 = vadd.f32 %v2226, %v2227
    %v2229 = vsel %vm52, %v2189, 0.0
    %v2230 = vadd.f32 %v2228, %v2229
    %v2231 = vsel %vm52, %v2190, 0.0
    %v2232 = vadd.f32 %v2230, %v2231
    %v2233 = vsel %vm52, %v2191, 0.0
    %v2234 = vadd.f32 %v2232, %v2233
    %v2235 = vsel %vm52, %v2192, 0.0
    %v2236 = vadd.f32 %v2234, %v2235
    %v2237 = vsel %vm52, %v2193, 0.0
    %v2238 = vadd.f32 %v2236, %v2237
    %v2239 = vsel %vm52, %v2194, 0.0
    %v2240 = vadd.f32 %v2238, %v2239
    %v2241 = vsel %vm52, %v2195, 0.0
    %v2242 = vadd.f32 %v2240, %v2241
    %2243 = vadd.xlane.f32.xlu0 %v2242
    %v2244 = vpop.xlane.xlu0 %2243
    %v2245 = vadd.f32 %v1983, %v2244
    %s2246 = scalar_lea.vmem %s1, 257
    %v2247 = vld [vmem:[%s2246] ss:$2 sm:$0xff]
    %s2248 = scalar_lea.vmem %s1, 273
    %v2249 = vld [vmem:[%s2248] ss:$2 sm:$0xff]
    %v2252 = vperm.slane %v2247, 0
    %v2253 = vperm.slane %v2247, 1
    %v2254 = vperm.slane %v2247, 2
    %v2255 = vperm.slane %v2247, 3
    %v2256 = vperm.slane %v2247, 4
    %v2257 = vperm.slane %v2247, 5
    %v2258 = vperm.slane %v2247, 6
    %v2259 = vperm.slane %v2247, 7
    %v2260 = vperm.slane %v2249, 0
    %v2261 = vperm.slane %v2249, 1
    %v2262 = vperm.slane %v2249, 2
    %v2263 = vperm.slane %v2249, 3
    %v2264 = vperm.slane %v2249, 4
    %v2265 = vperm.slane %v2249, 5
    %v2266 = vperm.slane %v2249, 6
    %v2267 = vperm.slane %v2249, 7
    %v2268 = vrot.slane %v2253, 6
    %v2269 = vrot.slane %v2254, 4
    %v2270 = vrot.slane %v2255, 2
    %v2271 = vrot.slane %v2257, 6
    %v2272 = vrot.slane %v2258, 4
    %v2273 = vrot.slane %v2259, 2
    %v2274 = vrot.slane %v2261, 6
    %v2275 = vrot.slane %v2262, 4
    %v2276 = vrot.slane %v2263, 2
    %v2277 = vrot.slane %v2265, 6
    %v2278 = vrot.slane %v2266, 4
    %v2279 = vrot.slane %v2267, 2
    %v2280 = vsel %vm52, %v2252, %v2268
    %v2281 = vsel %vm54, %v2269, %v2270
    %v2282 = vsel %vm56, %v2280, %v2281
    %v2283 = vsel %vm52, %v2256, %v2271
    %v2284 = vsel %vm54, %v2272, %v2273
    %v2285 = vsel %vm56, %v2283, %v2284
    %v2286 = vsel %vm52, %v2260, %v2274
    %v2287 = vsel %vm54, %v2275, %v2276
    %v2288 = vsel %vm56, %v2286, %v2287
    %v2289 = vsel %vm52, %v2264, %v2277
    %v2290 = vsel %vm54, %v2278, %v2279
    %v2291 = vsel %vm56, %v2289, %v2290
    %v2296 = vmul.f32 %v2113, %v2282
    %v2297 = vmul.f32 %v2114, %v2285
    %v2298 = vmul.f32 %v2115, %v2288
    %v2299 = vmul.f32 %v2116, %v2291
    %2304 = vst [vmem:[#allocation1] ss:$4 sm:$0xff] %v2296
    %s2305 = scalar_lea.vmem [#allocation1], 32
    %2306 = vst [vmem:[%s2305] ss:$4 sm:$0xff] %v2297
    %v2307 = vld.sshfl [vmem:[#allocation1] sm:$0xff pattern:$0x73625140]
    %v2308 = vld.sshfl [vmem:[#allocation1 + $0x8] sm:$0xff pattern:$0x73625140]
    %v2309 = vld.sshfl [vmem:[#allocation1 + $0x10] sm:$0xff pattern:$0x73625140]
    %v2310 = vld.sshfl [vmem:[#allocation1 + $0x18] sm:$0xff pattern:$0x73625140]
    %v2311 = vld.sshfl [vmem:[#allocation1 + $0x20] sm:$0xff pattern:$0x73625140]
    %v2312 = vld.sshfl [vmem:[#allocation1 + $0x28] sm:$0xff pattern:$0x73625140]
    %v2313 = vld.sshfl [vmem:[#allocation1 + $0x30] sm:$0xff pattern:$0x73625140]
    %v2314 = vld.sshfl [vmem:[#allocation1 + $0x38] sm:$0xff pattern:$0x73625140]
    %2315 = vst [vmem:[#allocation1] ss:$4 sm:$0xff] %v2298
    %2316 = vst [vmem:[%s2305] ss:$4 sm:$0xff] %v2299
    %v2317 = vld.sshfl [vmem:[#allocation1] sm:$0xff pattern:$0x73625140]
    %v2318 = vld.sshfl [vmem:[#allocation1 + $0x8] sm:$0xff pattern:$0x73625140]
    %v2319 = vld.sshfl [vmem:[#allocation1 + $0x10] sm:$0xff pattern:$0x73625140]
    %v2320 = vld.sshfl [vmem:[#allocation1 + $0x18] sm:$0xff pattern:$0x73625140]
    %v2321 = vld.sshfl [vmem:[#allocation1 + $0x20] sm:$0xff pattern:$0x73625140]
    %v2322 = vld.sshfl [vmem:[#allocation1 + $0x28] sm:$0xff pattern:$0x73625140]
    %v2323 = vld.sshfl [vmem:[#allocation1 + $0x30] sm:$0xff pattern:$0x73625140]
    %v2324 = vld.sshfl [vmem:[#allocation1 + $0x38] sm:$0xff pattern:$0x73625140]
    %v2341 = vsel %vm52, %v2307, 0.0
    %v2342 = vsel %vm52, %v2308, 0.0
    %v2343 = vadd.f32 %v2341, %v2342
    %v2344 = vsel %vm52, %v2309, 0.0
    %v2345 = vadd.f32 %v2343, %v2344
    %v2346 = vsel %vm52, %v2310, 0.0
    %v2347 = vadd.f32 %v2345, %v2346
    %v2348 = vsel %vm52, %v2311, 0.0
    %v2349 = vadd.f32 %v2347, %v2348
    %v2350 = vsel %vm52, %v2312, 0.0
    %v2351 = vadd.f32 %v2349, %v2350
    %v2352 = vsel %vm52, %v2313, 0.0
    %v2353 = vadd.f32 %v2351, %v2352
    %v2354 = vsel %vm52, %v2314, 0.0
    %v2355 = vadd.f32 %v2353, %v2354
    %v2356 = vsel %vm52, %v2317, 0.0
    %v2357 = vadd.f32 %v2355, %v2356
    %v2358 = vsel %vm52, %v2318, 0.0
    %v2359 = vadd.f32 %v2357, %v2358
    %v2360 = vsel %vm52, %v2319, 0.0
    %v2361 = vadd.f32 %v2359, %v2360
    %v2362 = vsel %vm52, %v2320, 0.0
    %v2363 = vadd.f32 %v2361, %v2362
    %v2364 = vsel %vm52, %v2321, 0.0
    %v2365 = vadd.f32 %v2363, %v2364
    %v2366 = vsel %vm52, %v2322, 0.0
    %v2367 = vadd.f32 %v2365, %v2366
    %v2368 = vsel %vm52, %v2323, 0.0
    %v2369 = vadd.f32 %v2367, %v2368
    %v2370 = vsel %vm52, %v2324, 0.0
    %v2371 = vadd.f32 %v2369, %v2370
    %2372 = vadd.xlane.f32.xlu0 %v2371
    %v2373 = vpop.xlane.xlu0 %2372
    %v2374 = vadd.f32 %v2112, %v2373
    %v2375 = vld [vmem:[%s0 + $0x120] sm:$0xff]
    %v2376 = vld [vmem:[%s0 + $0x128] sm:$0xff]
    %v2377 = vld [vmem:[%s0 + $0x130] sm:$0xff]
    %v2378 = vld [vmem:[%s0 + $0x138] sm:$0xff]
    %s2379 = scalar_lea.vmem %s1, 288
    %v2380 = vld [vmem:[%s2379] ss:$2 sm:$0xff]
    %s2381 = scalar_lea.vmem %s1, 304
    %v2382 = vld [vmem:[%s2381] ss:$2 sm:$0xff]
    %v2385 = vperm.slane %v2380, 0
    %v2386 = vperm.slane %v2380, 1
    %v2387 = vperm.slane %v2380, 2
    %v2388 = vperm.slane %v2380, 3
    %v2389 = vperm.slane %v2380, 4
    %v2390 = vperm.slane %v2380, 5
    %v2391 = vperm.slane %v2380, 6
    %v2392 = vperm.slane %v2380, 7
    %v2393 = vperm.slane %v2382, 0
    %v2394 = vperm.slane %v2382, 1
    %v2395 = vperm.slane %v2382, 2
    %v2396 = vperm.slane %v2382, 3
    %v2397 = vperm.slane %v2382, 4
    %v2398 = vperm.slane %v2382, 5
    %v2399 = vperm.slane %v2382, 6
    %v2400 = vperm.slane %v2382, 7
    %v2401 = vrot.slane %v2386, 6
    %v2402 = vrot.slane %v2387, 4
    %v2403 = vrot.slane %v2388, 2
    %v2404 = vrot.slane %v2390, 6
    %v2405 = vrot.slane %v2391, 4
    %v2406 = vrot.slane %v2392, 2
    %v2407 = vrot.slane %v2394, 6
    %v2408 = vrot.slane %v2395, 4
    %v2409 = vrot.slane %v2396, 2
    %v2410 = vrot.slane %v2398, 6
    %v2411 = vrot.slane %v2399, 4
    %v2412 = vrot.slane %v2400, 2
    %v2413 = vsel %vm52, %v2385, %v2401
    %v2414 = vsel %vm54, %v2402, %v2403
    %v2415 = vsel %vm56, %v2413, %v2414
    %v2416 = vsel %vm52, %v2389, %v2404
    %v2417 = vsel %vm54, %v2405, %v2406
    %v2418 = vsel %vm56, %v2416, %v2417
    %v2419 = vsel %vm52, %v2393, %v2407
    %v2420 = vsel %vm54, %v2408, %v2409
    %v2421 = vsel %vm56, %v2419, %v2420
    %v2422 = vsel %vm52, %v2397, %v2410
    %v2423 = vsel %vm54, %v2411, %v2412
    %v2424 = vsel %vm56, %v2422, %v2423
    %v2429 = vmul.f32 %v2375, %v2415
    %v2430 = vmul.f32 %v2376, %v2418
    %v2431 = vmul.f32 %v2377, %v2421
    %v2432 = vmul.f32 %v2378, %v2424
    %2437 = vst [vmem:[#allocation1] ss:$4 sm:$0xff] %v2429
    %s2438 = scalar_lea.vmem [#allocation1], 32
    %2439 = vst [vmem:[%s2438] ss:$4 sm:$0xff] %v2430
    %v2440 = vld.sshfl [vmem:[#allocation1] sm:$0xff pattern:$0x73625140]
    %v2441 = vld.sshfl [vmem:[#allocation1 + $0x8] sm:$0xff pattern:$0x73625140]
    %v2442 = vld.sshfl [vmem:[#allocation1 + $0x10] sm:$0xff pattern:$0x73625140]
    %v2443 = vld.sshfl [vmem:[#allocation1 + $0x18] sm:$0xff pattern:$0x73625140]
    %v2444 = vld.sshfl [vmem:[#allocation1 + $0x20] sm:$0xff pattern:$0x73625140]
    %v2445 = vld.sshfl [vmem:[#allocation1 + $0x28] sm:$0xff pattern:$0x73625140]
    %v2446 = vld.sshfl [vmem:[#allocation1 + $0x30] sm:$0xff pattern:$0x73625140]
    %v2447 = vld.sshfl [vmem:[#allocation1 + $0x38] sm:$0xff pattern:$0x73625140]
    %2448 = vst [vmem:[#allocation1] ss:$4 sm:$0xff] %v2431
    %2449 = vst [vmem:[%s2438] ss:$4 sm:$0xff] %v2432
    %v2450 = vld.sshfl [vmem:[#allocation1] sm:$0xff pattern:$0x73625140]
    %v2451 = vld.sshfl [vmem:[#allocation1 + $0x8] sm:$0xff pattern:$0x73625140]
    %v2452 = vld.sshfl [vmem:[#allocation1 + $0x10] sm:$0xff pattern:$0x73625140]
    %v2453 = vld.sshfl [vmem:[#allocation1 + $0x18] sm:$0xff pattern:$0x73625140]
    %v2454 = vld.sshfl [vmem:[#allocation1 + $0x20] sm:$0xff pattern:$0x73625140]
    %v2455 = vld.sshfl [vmem:[#allocation1 + $0x28] sm:$0xff pattern:$0x73625140]
    %v2456 = vld.sshfl [vmem:[#allocation1 + $0x30] sm:$0xff pattern:$0x73625140]
    %v2457 = vld.sshfl [vmem:[#allocation1 + $0x38] sm:$0xff pattern:$0x73625140]
    %v2474 = vsel %vm52, %v2440, 0.0
    %v2475 = vsel %vm52, %v2441, 0.0
    %v2476 = vadd.f32 %v2474, %v2475
    %v2477 = vsel %vm52, %v2442, 0.0
    %v2478 = vadd.f32 %v2476, %v2477
    %v2479 = vsel %vm52, %v2443, 0.0
    %v2480 = vadd.f32 %v2478, %v2479
    %v2481 = vsel %vm52, %v2444, 0.0
    %v2482 = vadd.f32 %v2480, %v2481
    %v2483 = vsel %vm52, %v2445, 0.0
    %v2484 = vadd.f32 %v2482, %v2483
    %v2485 = vsel %vm52, %v2446, 0.0
    %v2486 = vadd.f32 %v2484, %v2485
    %v2487 = vsel %vm52, %v2447, 0.0
    %v2488 = vadd.f32 %v2486, %v2487
    %v2489 = vsel %vm52, %v2450, 0.0
    %v2490 = vadd.f32 %v2488, %v2489
    %v2491 = vsel %vm52, %v2451, 0.0
    %v2492 = vadd.f32 %v2490, %v2491
    %v2493 = vsel %vm52, %v2452, 0.0
    %v2494 = vadd.f32 %v2492, %v2493
    %v2495 = vsel %vm52, %v2453, 0.0
    %v2496 = vadd.f32 %v2494, %v2495
    %v2497 = vsel %vm52, %v2454, 0.0
    %v2498 = vadd.f32 %v2496, %v2497
    %v2499 = vsel %vm52, %v2455, 0.0
    %v2500 = vadd.f32 %v2498, %v2499
    %v2501 = vsel %vm52, %v2456, 0.0
    %v2502 = vadd.f32 %v2500, %v2501
    %v2503 = vsel %vm52, %v2457, 0.0
    %v2504 = vadd.f32 %v2502, %v2503
    %2505 = vadd.xlane.f32.xlu0 %v2504
    %v2506 = vpop.xlane.xlu0 %2505
    %v2507 = vadd.f32 %v2245, %v2506
    %s2508 = scalar_lea.vmem %s1, 289
    %v2509 = vld [vmem:[%s2508] ss:$2 sm:$0xff]
    %s2510 = scalar_lea.vmem %s1, 305
    %v2511 = vld [vmem:[%s2510] ss:$2 sm:$0xff]
    %v2514 = vperm.slane %v2509, 0
    %v2515 = vperm.slane %v2509, 1
    %v2516 = vperm.slane %v2509, 2
    %v2517 = vperm.slane %v2509, 3
    %v2518 = vperm.slane %v2509, 4
    %v2519 = vperm.slane %v2509, 5
    %v2520 = vperm.slane %v2509, 6
    %v2521 = vperm.slane %v2509, 7
    %v2522 = vperm.slane %v2511, 0
    %v2523 = vperm.slane %v2511, 1
    %v2524 = vperm.slane %v2511, 2
    %v2525 = vperm.slane %v2511, 3
    %v2526 = vperm.slane %v2511, 4
    %v2527 = vperm.slane %v2511, 5
    %v2528 = vperm.slane %v2511, 6
    %v2529 = vperm.slane %v2511, 7
    %v2530 = vrot.slane %v2515, 6
    %v2531 = vrot.slane %v2516, 4
    %v2532 = vrot.slane %v2517, 2
    %v2533 = vrot.slane %v2519, 6
    %v2534 = vrot.slane %v2520, 4
    %v2535 = vrot.slane %v2521, 2
    %v2536 = vrot.slane %v2523, 6
    %v2537 = vrot.slane %v2524, 4
    %v2538 = vrot.slane %v2525, 2
    %v2539 = vrot.slane %v2527, 6
    %v2540 = vrot.slane %v2528, 4
    %v2541 = vrot.slane %v2529, 2
    %v2542 = vsel %vm52, %v2514, %v2530
    %v2543 = vsel %vm54, %v2531, %v2532
    %v2544 = vsel %vm56, %v2542, %v2543
    %v2545 = vsel %vm52, %v2518, %v2533
    %v2546 = vsel %vm54, %v2534, %v2535
    %v2547 = vsel %vm56, %v2545, %v2546
    %v2548 = vsel %vm52, %v2522, %v2536
    %v2549 = vsel %vm54, %v2537, %v2538
    %v2550 = vsel %vm56, %v2548, %v2549
    %v2551 = vsel %vm52, %v2526, %v2539
    %v2552 = vsel %vm54, %v2540, %v2541
    %v2553 = vsel %vm56, %v2551, %v2552
    %v2558 = vmul.f32 %v2375, %v2544
    %v2559 = vmul.f32 %v2376, %v2547
    %v2560 = vmul.f32 %v2377, %v2550
    %v2561 = vmul.f32 %v2378, %v2553
    %2566 = vst [vmem:[#allocation1] ss:$4 sm:$0xff] %v2558
    %s2567 = scalar_lea.vmem [#allocation1], 32
    %2568 = vst [vmem:[%s2567] ss:$4 sm:$0xff] %v2559
    %v2569 = vld.sshfl [vmem:[#allocation1] sm:$0xff pattern:$0x73625140]
    %v2570 = vld.sshfl [vmem:[#allocation1 + $0x8] sm:$0xff pattern:$0x73625140]
    %v2571 = vld.sshfl [vmem:[#allocation1 + $0x10] sm:$0xff pattern:$0x73625140]
    %v2572 = vld.sshfl [vmem:[#allocation1 + $0x18] sm:$0xff pattern:$0x73625140]
    %v2573 = vld.sshfl [vmem:[#allocation1 + $0x20] sm:$0xff pattern:$0x73625140]
    %v2574 = vld.sshfl [vmem:[#allocation1 + $0x28] sm:$0xff pattern:$0x73625140]
    %v2575 = vld.sshfl [vmem:[#allocation1 + $0x30] sm:$0xff pattern:$0x73625140]
    %v2576 = vld.sshfl [vmem:[#allocation1 + $0x38] sm:$0xff pattern:$0x73625140]
    %2577 = vst [vmem:[#allocation1] ss:$4 sm:$0xff] %v2560
    %2578 = vst [vmem:[%s2567] ss:$4 sm:$0xff] %v2561
    %v2579 = vld.sshfl [vmem:[#allocation1] sm:$0xff pattern:$0x73625140]
    %v2580 = vld.sshfl [vmem:[#allocation1 + $0x8] sm:$0xff pattern:$0x73625140]
    %v2581 = vld.sshfl [vmem:[#allocation1 + $0x10] sm:$0xff pattern:$0x73625140]
    %v2582 = vld.sshfl [vmem:[#allocation1 + $0x18] sm:$0xff pattern:$0x73625140]
    %v2583 = vld.sshfl [vmem:[#allocation1 + $0x20] sm:$0xff pattern:$0x73625140]
    %v2584 = vld.sshfl [vmem:[#allocation1 + $0x28] sm:$0xff pattern:$0x73625140]
    %v2585 = vld.sshfl [vmem:[#allocation1 + $0x30] sm:$0xff pattern:$0x73625140]
    %v2586 = vld.sshfl [vmem:[#allocation1 + $0x38] sm:$0xff pattern:$0x73625140]
    %v2603 = vsel %vm52, %v2569, 0.0
    %v2604 = vsel %vm52, %v2570, 0.0
    %v2605 = vadd.f32 %v2603, %v2604
    %v2606 = vsel %vm52, %v2571, 0.0
    %v2607 = vadd.f32 %v2605, %v2606
    %v2608 = vsel %vm52, %v2572, 0.0
    %v2609 = vadd.f32 %v2607, %v2608
    %v2610 = vsel %vm52, %v2573, 0.0
    %v2611 = vadd.f32 %v2609, %v2610
    %v2612 = vsel %vm52, %v2574, 0.0
    %v2613 = vadd.f32 %v2611, %v2612
    %v2614 = vsel %vm52, %v2575, 0.0
    %v2615 = vadd.f32 %v2613, %v2614
    %v2616 = vsel %vm52, %v2576, 0.0
    %v2617 = vadd.f32 %v2615, %v2616
    %v2618 = vsel %vm52, %v2579, 0.0
    %v2619 = vadd.f32 %v2617, %v2618
    %v2620 = vsel %vm52, %v2580, 0.0
    %v2621 = vadd.f32 %v2619, %v2620
    %v2622 = vsel %vm52, %v2581, 0.0
    %v2623 = vadd.f32 %v2621, %v2622
    %v2624 = vsel %vm52, %v2582, 0.0
    %v2625 = vadd.f32 %v2623, %v2624
    %v2626 = vsel %vm52, %v2583, 0.0
    %v2627 = vadd.f32 %v2625, %v2626
    %v2628 = vsel %vm52, %v2584, 0.0
    %v2629 = vadd.f32 %v2627, %v2628
    %v2630 = vsel %vm52, %v2585, 0.0
    %v2631 = vadd.f32 %v2629, %v2630
    %v2632 = vsel %vm52, %v2586, 0.0
    %v2633 = vadd.f32 %v2631, %v2632
    %2634 = vadd.xlane.f32.xlu0 %v2633
    %v2635 = vpop.xlane.xlu0 %2634
    %v2636 = vadd.f32 %v2374, %v2635
    %v2637 = vld [vmem:[%s0 + $0x140] sm:$0xff]
    %v2638 = vld [vmem:[%s0 + $0x148] sm:$0xff]
    %v2639 = vld [vmem:[%s0 + $0x150] sm:$0xff]
    %v2640 = vld [vmem:[%s0 + $0x158] sm:$0xff]
    %s2641 = scalar_lea.vmem %s1, 320
    %v2642 = vld [vmem:[%s2641] ss:$2 sm:$0xff]
    %s2643 = scalar_lea.vmem %s1, 336
    %v2644 = vld [vmem:[%s2643] ss:$2 sm:$0xff]
    %v2647 = vperm.slane %v2642, 0
    %v2648 = vperm.slane %v2642, 1
    %v2649 = vperm.slane %v2642, 2
    %v2650 = vperm.slane %v2642, 3
    %v2651 = vperm.slane %v2642, 4
    %v2652 = vperm.slane %v2642, 5
    %v2653 = vperm.slane %v2642, 6
    %v2654 = vperm.slane %v2642, 7
    %v2655 = vperm.slane %v2644, 0
    %v2656 = vperm.slane %v2644, 1
    %v2657 = vperm.slane %v2644, 2
    %v2658 = vperm.slane %v2644, 3
    %v2659 = vperm.slane %v2644, 4
    %v2660 = vperm.slane %v2644, 5
    %v2661 = vperm.slane %v2644, 6
    %v2662 = vperm.slane %v2644, 7
    %v2663 = vrot.slane %v2648, 6
    %v2664 = vrot.slane %v2649, 4
    %v2665 = vrot.slane %v2650, 2
    %v2666 = vrot.slane %v2652, 6
    %v2667 = vrot.slane %v2653, 4
    %v2668 = vrot.slane %v2654, 2
    %v2669 = vrot.slane %v2656, 6
    %v2670 = vrot.slane %v2657, 4
    %v2671 = vrot.slane %v2658, 2
    %v2672 = vrot.slane %v2660, 6
    %v2673 = vrot.slane %v2661, 4
    %v2674 = vrot.slane %v2662, 2
    %v2675 = vsel %vm52, %v2647, %v2663
    %v2676 = vsel %vm54, %v2664, %v2665
    %v2677 = vsel %vm56, %v2675, %v2676
    %v2678 = vsel %vm52, %v2651, %v2666
    %v2679 = vsel %vm54, %v2667, %v2668
    %v2680 = vsel %vm56, %v2678, %v2679
    %v2681 = vsel %vm52, %v2655, %v2669
    %v2682 = vsel %vm54, %v2670, %v2671
    %v2683 = vsel %vm56, %v2681, %v2682
    %v2684 = vsel %vm52, %v2659, %v2672
    %v2685 = vsel %vm54, %v2673, %v2674
    %v2686 = vsel %vm56, %v2684, %v2685
    %v2691 = vmul.f32 %v2637, %v2677
    %v2692 = vmul.f32 %v2638, %v2680
    %v2693 = vmul.f32 %v2639, %v2683
    %v2694 = vmul.f32 %v2640, %v2686
    %2699 = vst [vmem:[#allocation1] ss:$4 sm:$0xff] %v2691
    %s2700 = scalar_lea.vmem [#allocation1], 32
    %2701 = vst [vmem:[%s2700] ss:$4 sm:$0xff] %v2692
    %v2702 = vld.sshfl [vmem:[#allocation1] sm:$0xff pattern:$0x73625140]
    %v2703 = vld.sshfl [vmem:[#allocation1 + $0x8] sm:$0xff pattern:$0x73625140]
    %v2704 = vld.sshfl [vmem:[#allocation1 + $0x10] sm:$0xff pattern:$0x73625140]
    %v2705 = vld.sshfl [vmem:[#allocation1 + $0x18] sm:$0xff pattern:$0x73625140]
    %v2706 = vld.sshfl [vmem:[#allocation1 + $0x20] sm:$0xff pattern:$0x73625140]
    %v2707 = vld.sshfl [vmem:[#allocation1 + $0x28] sm:$0xff pattern:$0x73625140]
    %v2708 = vld.sshfl [vmem:[#allocation1 + $0x30] sm:$0xff pattern:$0x73625140]
    %v2709 = vld.sshfl [vmem:[#allocation1 + $0x38] sm:$0xff pattern:$0x73625140]
    %2710 = vst [vmem:[#allocation1] ss:$4 sm:$0xff] %v2693
    %2711 = vst [vmem:[%s2700] ss:$4 sm:$0xff] %v2694
    %v2712 = vld.sshfl [vmem:[#allocation1] sm:$0xff pattern:$0x73625140]
    %v2713 = vld.sshfl [vmem:[#allocation1 + $0x8] sm:$0xff pattern:$0x73625140]
    %v2714 = vld.sshfl [vmem:[#allocation1 + $0x10] sm:$0xff pattern:$0x73625140]
    %v2715 = vld.sshfl [vmem:[#allocation1 + $0x18] sm:$0xff pattern:$0x73625140]
    %v2716 = vld.sshfl [vmem:[#allocation1 + $0x20] sm:$0xff pattern:$0x73625140]
    %v2717 = vld.sshfl [vmem:[#allocation1 + $0x28] sm:$0xff pattern:$0x73625140]
    %v2718 = vld.sshfl [vmem:[#allocation1 + $0x30] sm:$0xff pattern:$0x73625140]
    %v2719 = vld.sshfl [vmem:[#allocation1 + $0x38] sm:$0xff pattern:$0x73625140]
    %v2736 = vsel %vm52, %v2702, 0.0
    %v2737 = vsel %vm52, %v2703, 0.0
    %v2738 = vadd.f32 %v2736, %v2737
    %v2739 = vsel %vm52, %v2704, 0.0
    %v2740 = vadd.f32 %v2738, %v2739
    %v2741 = vsel %vm52, %v2705, 0.0
    %v2742 = vadd.f32 %v2740, %v2741
    %v2743 = vsel %vm52, %v2706, 0.0
    %v2744 = vadd.f32 %v2742, %v2743
    %v2745 = vsel %vm52, %v2707, 0.0
    %v2746 = vadd.f32 %v2744, %v2745
    %v2747 = vsel %vm52, %v2708, 0.0
    %v2748 = vadd.f32 %v2746, %v2747
    %v2749 = vsel %vm52, %v2709, 0.0
    %v2750 = vadd.f32 %v2748, %v2749
    %v2751 = vsel %vm52, %v2712, 0.0
    %v2752 = vadd.f32 %v2750, %v2751
    %v2753 = vsel %vm52, %v2713, 0.0
    %v2754 = vadd.f32 %v2752, %v2753
    %v2755 = vsel %vm52, %v2714, 0.0
    %v2756 = vadd.f32 %v2754, %v2755
    %v2757 = vsel %vm52, %v2715, 0.0
    %v2758 = vadd.f32 %v2756, %v2757
    %v2759 = vsel %vm52, %v2716, 0.0
    %v2760 = vadd.f32 %v2758, %v2759
    %v2761 = vsel %vm52, %v2717, 0.0
    %v2762 = vadd.f32 %v2760, %v2761
    %v2763 = vsel %vm52, %v2718, 0.0
    %v2764 = vadd.f32 %v2762, %v2763
    %vm2765 = vcmask 812032
    %v2766 = vsel %vm2765, %v2719, 0.0
    %v2767 = vadd.f32 %v2764, %v2766
    %2768 = vadd.xlane.f32.xlu0 %v2767
    %v2769 = vpop.xlane.xlu0 %2768
    %v2770 = vadd.f32 %v2507, %v2769
    %s2771 = scalar_lea.vmem %s1, 321
    %v2772 = vld [vmem:[%s2771] ss:$2 sm:$0xff]
    %s2773 = scalar_lea.vmem %s1, 337
    %v2774 = vld [vmem:[%s2773] ss:$2 sm:$0xff]
    %v2777 = vperm.slane %v2772, 0
    %v2778 = vperm.slane %v2772, 1
    %v2779 = vperm.slane %v2772, 2
    %v2780 = vperm.slane %v2772, 3
    %v2781 = vperm.slane %v2772, 4
    %v2782 = vperm.slane %v2772, 5
    %v2783 = vperm.slane %v2772, 6
    %v2784 = vperm.slane %v2772, 7
    %v2785 = vperm.slane %v2774, 0
    %v2786 = vperm.slane %v2774, 1
    %v2787 = vperm.slane %v2774, 2
    %v2788 = vperm.slane %v2774, 3
    %v2789 = vperm.slane %v2774, 4
    %v2790 = vperm.slane %v2774, 5
    %v2791 = vperm.slane %v2774, 6
    %v2792 = vperm.slane %v2774, 7
    %v2793 = vrot.slane %v2778, 6
    %v2794 = vrot.slane %v2779, 4
    %v2795 = vrot.slane %v2780, 2
    %v2796 = vrot.slane %v2782, 6
    %v2797 = vrot.slane %v2783, 4
    %v2798 = vrot.slane %v2784, 2
    %v2799 = vrot.slane %v2786, 6
    %v2800 = vrot.slane %v2787, 4
    %v2801 = vrot.slane %v2788, 2
    %v2802 = vrot.slane %v2790, 6
    %v2803 = vrot.slane %v2791, 4
    %v2804 = vrot.slane %v2792, 2
    %v2805 = vsel %vm52, %v2777, %v2793
    %v2806 = vsel %vm54, %v2794, %v2795
    %v2807 = vsel %vm56, %v2805, %v2806
    %v2808 = vsel %vm52, %v2781, %v2796
    %v2809 = vsel %vm54, %v2797, %v2798
    %v2810 = vsel %vm56, %v2808, %v2809
    %v2811 = vsel %vm52, %v2785, %v2799
    %v2812 = vsel %vm54, %v2800, %v2801
    %v2813 = vsel %vm56, %v2811, %v2812
    %v2814 = vsel %vm52, %v2789, %v2802
    %v2815 = vsel %vm54, %v2803, %v2804
    %v2816 = vsel %vm56, %v2814, %v2815
    %v2821 = vmul.f32 %v2637, %v2807
    %v2822 = vmul.f32 %v2638, %v2810
    %v2823 = vmul.f32 %v2639, %v2813
    %v2824 = vmul.f32 %v2640, %v2816
    %2829 = vst [vmem:[#allocation1] ss:$4 sm:$0xff] %v2821
    %s2830 = scalar_lea.vmem [#allocation1], 32
    %2831 = vst [vmem:[%s2830] ss:$4 sm:$0xff] %v2822
    %v2832 = vld.sshfl [vmem:[#allocation1] sm:$0xff pattern:$0x73625140]
    %v2833 = vld.sshfl [vmem:[#allocation1 + $0x8] sm:$0xff pattern:$0x73625140]
    %v2834 = vld.sshfl [vmem:[#allocation1 + $0x10] sm:$0xff pattern:$0x73625140]
    %v2835 = vld.sshfl [vmem:[#allocation1 + $0x18] sm:$0xff pattern:$0x73625140]
    %v2836 = vld.sshfl [vmem:[#allocation1 + $0x20] sm:$0xff pattern:$0x73625140]
    %v2837 = vld.sshfl [vmem:[#allocation1 + $0x28] sm:$0xff pattern:$0x73625140]
    %v2838 = vld.sshfl [vmem:[#allocation1 + $0x30] sm:$0xff pattern:$0x73625140]
    %v2839 = vld.sshfl [vmem:[#allocation1 + $0x38] sm:$0xff pattern:$0x73625140]
    %2840 = vst [vmem:[#allocation1] ss:$4 sm:$0xff] %v2823
    %2841 = vst [vmem:[%s2830] ss:$4 sm:$0xff] %v2824
    %v2842 = vld.sshfl [vmem:[#allocation1] sm:$0xff pattern:$0x73625140]
    %v2843 = vld.sshfl [vmem:[#allocation1 + $0x8] sm:$0xff pattern:$0x73625140]
    %v2844 = vld.sshfl [vmem:[#allocation1 + $0x10] sm:$0xff pattern:$0x73625140]
    %v2845 = vld.sshfl [vmem:[#allocation1 + $0x18] sm:$0xff pattern:$0x73625140]
    %v2846 = vld.sshfl [vmem:[#allocation1 + $0x20] sm:$0xff pattern:$0x73625140]
    %v2847 = vld.sshfl [vmem:[#allocation1 + $0x28] sm:$0xff pattern:$0x73625140]
    %v2848 = vld.sshfl [vmem:[#allocation1 + $0x30] sm:$0xff pattern:$0x73625140]
    %v2849 = vld.sshfl [vmem:[#allocation1 + $0x38] sm:$0xff pattern:$0x73625140]
    %v2866 = vsel %vm52, %v2832, 0.0
    %v2867 = vsel %vm52, %v2833, 0.0
    %v2868 = vadd.f32 %v2866, %v2867
    %v2869 = vsel %vm52, %v2834, 0.0
    %v2870 = vadd.f32 %v2868, %v2869
    %v2871 = vsel %vm52, %v2835, 0.0
    %v2872 = vadd.f32 %v2870, %v2871
    %v2873 = vsel %vm52, %v2836, 0.0
    %v2874 = vadd.f32 %v2872, %v2873
    %v2875 = vsel %vm52, %v2837, 0.0
    %v2876 = vadd.f32 %v2874, %v2875
    %v2877 = vsel %vm52, %v2838, 0.0
    %v2878 = vadd.f32 %v2876, %v2877
    %v2879 = vsel %vm52, %v2839, 0.0
    %v2880 = vadd.f32 %v2878, %v2879
    %v2881 = vsel %vm52, %v2842, 0.0
    %v2882 = vadd.f32 %v2880, %v2881
    %v2883 = vsel %vm52, %v2843, 0.0
    %v2884 = vadd.f32 %v2882, %v2883
    %v2885 = vsel %vm52, %v2844, 0.0
    %v2886 = vadd.f32 %v2884, %v2885
    %v2887 = vsel %vm52, %v2845, 0.0
    %v2888 = vadd.f32 %v2886, %v2887
    %v2889 = vsel %vm52, %v2846, 0.0
    %v2890 = vadd.f32 %v2888, %v2889
    %v2891 = vsel %vm52, %v2847, 0.0
    %v2892 = vadd.f32 %v2890, %v2891
    %v2893 = vsel %vm52, %v2848, 0.0
    %v2894 = vadd.f32 %v2892, %v2893
    %v2895 = vsel %vm2765, %v2849, 0.0
    %v2896 = vadd.f32 %v2894, %v2895
    %2897 = vadd.xlane.f32.xlu0 %v2896
    %v2898 = vpop.xlane.xlu0 %2897
    %v2899 = vadd.f32 %v2636, %v2898
    %vm2900 = vcmask 7168
    %v2901 = vsel %vm2900, %v2770, %v2899
    %v2902 = vld [vmem:[%s2] sm:$0x1]
    %v2904 = vperm.slane %v2902, 0
    %v2906 = vadd.f32 %v2901, %v2904
    %vm2907 = vcmask 9216
    %v2908 = vsel %vm2907, %v2906, -inf
    %2909 = vmax.xlane.f32.xlu0 %v2908
    %v2910 = vpop.xlane.xlu0 %2909
    %v2911 = vsub.f32 %v2906, %v2910
    %v2912 = vmul.f32 %v2911, 1.442695
    %v2913 = vpow.pop %v2912
    %v2914 = vsel %vm2907, %v2913, 0.0
    %2915 = vadd.xlane.f32.xlu0 %v2914
    %v2916 = vpop.xlane.xlu0 %2915
    %v2917 = vlog2.pop %v2916
    %v2918 = vmul.f32 %v2917, 0.6931472
    %v2919 = vadd.f32 %v2910, %v2918
    %v2920 = vsub.f32 %v2906, %v2919
    %2921 = vst.msk [vmem:[#allocation2] sm:$0x3] %vm2907, %v2920
    // Predicated region
    $region14: #{net_forward.1} parent=1 // pred_check
      _
    $region15: #{net_forward.1} parent=1 // pred_check_branch
      %2923 = sbr.rel (0) target = $region17
    $region16: #{net_forward.1} parent=1 // pred_region
      %2925 = vsyncadd [#allocation3], 0
      %s2927 = sshll.u32 [#allocation2], 4
      %s2928 = int_to_ptr.vmem [resolvable:$true] %s2927
      %s2929 = sshll.u32 %s3, 4
      %s2930 = int_to_ptr.hbm [resolvable:$true] %s2929
      %2932 = dma.vmem_to_hbm [thread:$0]  %s2928, 32, %s2930, [#allocation3]
    $region17: #{net_forward.1} parent=1 // pred_fallthru
      _
    // Predicated region
    $region18: #{net_forward.1} parent=1 // pred_check
      _
    $region19: #{net_forward.1} parent=1 // pred_check_branch
      %2934 = sbr.rel (0) target = $region21
    $region20: #{net_forward.1} parent=1 // pred_region
      %2936 = dma.done [#allocation3], 32
    $region21: #{net_forward.1} parent=1 // pred_fallthru
      _
    %2937 = vsyncpa [#allocation3], 1

</llo_original>
